<compile_context>
chip_gen: v5e
topology: v5e:2x2
jax: 0.10.0
libtpu: 0.0.40
codegen_flags: <defaults>
</compile_context>

<pallas_src>
import math

import jax
import jax.numpy as jnp
from jax.experimental import pallas as pl
from jax.experimental.pallas import tpu as pltpu

LN_EPS = 1e-5                      # torch.nn.LayerNorm default
MIN_VAR = 1e-6
MAX_VAR = 1e6
LOG_MIN_VAR = math.log(MIN_VAR)
LOG_MAX_VAR = math.log(MAX_VAR)

HIDDEN = 400
N_VEC = 7                          # packed rows: b1, g1, be1, b2, g2, be2, b3


def _round_up(x, m):
    return ((x + m - 1) // m) * m


def _layernorm_fused(h, gamma, beta):
    """Single-pass LayerNorm: independent sum / sum-of-squares reductions."""
    inv_n = 1.0 / h.shape[-1]
    mu = jnp.sum(h, axis=-1, keepdims=True) * inv_n
    ex2 = jnp.sum(h * h, axis=-1, keepdims=True) * inv_n
    var = ex2 - mu * mu            # biased variance, matches torch
    return (h - mu) * jax.lax.rsqrt(var + LN_EPS) * gamma + beta


def dynamics_kernel(s_ref, a_ref, w1_ref, w2_ref, w3_ref, vec_ref, out_ref):
    """One grid step = one net (grid axis 0: 0=mean, 1=logvar) on one batch tile."""
    net = pl.program_id(0)
    out_dim = w3_ref.shape[1]

    # In-kernel lane concat of the (tb, S) and (tb, A) blocks -> one K=S+A matmul.
    x = jnp.concatenate([s_ref[...], a_ref[...]], axis=-1).astype(jnp.bfloat16)

    b1, g1, be1 = vec_ref[0:1, :], vec_ref[1:2, :], vec_ref[2:3, :]
    b2, g2, be2 = vec_ref[3:4, :], vec_ref[4:5, :], vec_ref[5:6, :]
    b3 = vec_ref[6:7, 0:out_dim]

    h = jnp.dot(x, w1_ref[...], preferred_element_type=jnp.float32) + b1
    h = _layernorm_fused(jnp.maximum(h, 0.0), g1, be1)
    # Dropout(0.1): identity in eval mode.
    h = jnp.dot(h.astype(jnp.bfloat16), w2_ref[...],
                preferred_element_type=jnp.float32) + b2
    h = _layernorm_fused(jnp.maximum(h, 0.0), g2, be2)
    y = jnp.dot(h.astype(jnp.bfloat16), w3_ref[...],
                preferred_element_type=jnp.float32) + b3

    # Lane-dense (tb, 128) output block: clear pad lanes, then prefix store.
    out_ref[...] = jnp.zeros(out_ref.shape, out_ref.dtype)

    @pl.when(net == 0)
    def _():
        out_ref[:, 0:out_dim] = y                                   # mean head

    @pl.when(net == 1)
    def _():                                                        # var head
        out_ref[:, 0:out_dim] = jnp.exp(jnp.clip(y, LOG_MIN_VAR, LOG_MAX_VAR))


def dynamics_forward(states, actions, params):
    """params: dict with
         'w1'  (2, S+A, H) bf16, 'w2' (2, H, H) bf16, 'w3' (2, H, S) bf16,
         'vec' (2, 7, H) f32  rows = [b1, g1, be1, b2, g2, be2, b3(pad)]
       leading axis 0 = mean net, 1 = logvar net."""
    states = states.astype(jnp.float32)
    actions = actions.astype(jnp.float32)
    batch, state_dim = states.shape
    action_dim = actions.shape[1]

    # Batch tiling: one block for small batches, 512-row tiles for rollouts.
    tb = min(512, _round_up(max(batch, 1), 8))
    padded_batch = _round_up(batch, tb)
    if padded_batch != batch:
        pad_rows = padded_batch - batch
        states = jnp.pad(states, ((0, pad_rows), (0, 0)))
        actions = jnp.pad(actions, ((0, pad_rows), (0, 0)))

    out_w = _round_up(state_dim, 128)          # lane-dense output block width

    def act_spec(feat):
        return pl.BlockSpec((tb, feat), lambda n, b: (b, 0))

    def net_spec(p):
        # Leading {mean, logvar} axis selected by grid axis 0; rest is the
        # full (small) weight slab, resident in VMEM across batch tiles.
        return pl.BlockSpec((None,) + p.shape[1:],
                            lambda n, b: (n,) + (0,) * (p.ndim - 1))

    out = pl.pallas_call(
        dynamics_kernel,
        out_shape=jax.ShapeDtypeStruct((2, padded_batch, out_w), jnp.float32),
        grid_spec=pltpu.PrefetchScalarGridSpec(
            num_scalar_prefetch=0,
            grid=(2, padded_batch // tb),
            in_specs=[act_spec(state_dim), act_spec(action_dim),
                      net_spec(params["w1"]), net_spec(params["w2"]),
                      net_spec(params["w3"]), net_spec(params["vec"])],
            out_specs=pl.BlockSpec((None, tb, out_w), lambda n, b: (n, b, 0)),
        ),
        compiler_params=pltpu.CompilerParams(
            dimension_semantics=("parallel", "parallel")),
    )(states, actions, params["w1"], params["w2"], params["w3"], params["vec"])

    mean = out[0, :batch, :state_dim]
    var = out[1, :batch, :state_dim]
    return mean, var


def init_dynamics_params(key, state_dim, action_dim, hidden=HIDDEN):
    """Mirrors DynamicsModel.__init__: xavier_normal_ weights, zero biases,
    default-affine LayerNorm; packed into the stacked kernel layout."""
    in_dim = state_dim + action_dim
    dims = [(in_dim, hidden), (hidden, hidden), (hidden, state_dim)]
    keys = jax.random.split(key, 6)
    w_stacks = [[], [], []]
    for n in range(2):                                   # 0 = mean, 1 = logvar
        for i, (fan_in, fan_out) in enumerate(dims):
            std = math.sqrt(2.0 / (fan_in + fan_out))
            w = std * jax.random.normal(keys[3 * n + i], (fan_in, fan_out),
                                        jnp.float32)
            w_stacks[i].append(w.astype(jnp.bfloat16))
    vec = jnp.zeros((2, N_VEC, hidden), jnp.float32)
    vec = vec.at[:, 1, :].set(1.0).at[:, 4, :].set(1.0)  # LayerNorm gammas = 1
    return {"w1": jnp.stack(w_stacks[0]),
            "w2": jnp.stack(w_stacks[1]),
            "w3": jnp.stack(w_stacks[2]),
            "vec": vec}


def _ln_ref(h, g, b):
    mu = jnp.mean(h, axis=-1, keepdims=True)
    v = jnp.mean((h - mu) ** 2, axis=-1, keepdims=True)
    return (h - mu) * jax.lax.rsqrt(v + LN_EPS) * g + b


def ref_forward(states, actions, params):
    """Pure-JAX reference with matching bf16-weight / f32-accumulate matmuls,
    standard two-pass LayerNorm, and torch-style exp-then-clamp variance."""
    x = jnp.concatenate([states, actions], axis=-1)
    outs = []
    for n in range(2):
        w1, w2, w3 = params["w1"][n], params["w2"][n], params["w3"][n]
        vec = params["vec"][n]
        b1, g1, be1 = vec[0:1], vec[1:2], vec[2:3]
        b2, g2, be2 = vec[3:4], vec[4:5], vec[5:6]
        b3 = vec[6:7, :w3.shape[1]]
        h = jnp.dot(x.astype(jnp.bfloat16), w1,
                    preferred_element_type=jnp.float32) + b1
        h = _ln_ref(jnp.maximum(h, 0.0), g1, be1)
        h = jnp.dot(h.astype(jnp.bfloat16), w2,
                    preferred_element_type=jnp.float32) + b2
        h = _ln_ref(jnp.maximum(h, 0.0), g2, be2)
        outs.append(jnp.dot(h.astype(jnp.bfloat16), w3,
                            preferred_element_type=jnp.float32) + b3)
    mean = outs[0]
    var = jnp.clip(jnp.exp(outs[1]), MIN_VAR, MAX_VAR)
    return mean, var


if __name__ == "__main__":
    state_dim, action_dim, batch = 16, 8, 8

    key = jax.random.PRNGKey(0)
    kparams, kstates, kactions, kvec = jax.random.split(key, 4)

    params = init_dynamics_params(kparams, state_dim, action_dim)
    # Perturb biases / LayerNorm affine params away from the torch init
    # (zeros / ones) so the self-test exercises those code paths too.
    params["vec"] = params["vec"] + 0.05 * jax.random.normal(
        kvec, params["vec"].shape, jnp.float32)

    states = jax.random.normal(kstates, (batch, state_dim), jnp.float32)
    actions = jax.random.normal(kactions, (batch, action_dim), jnp.float32)

    mean, var = dynamics_forward(states, actions, params)
    jax.block_until_ready((mean, var))

    ref_mean, ref_var = ref_forward(states, actions, params)

    assert mean.shape == (batch, state_dim) and var.shape == (batch, state_dim)
    assert bool(jnp.all(var >= MIN_VAR)) and bool(jnp.all(var <= MAX_VAR))
    assert jnp.allclose(mean, ref_mean, atol=2e-3, rtol=2e-3)
    assert jnp.allclose(var, ref_var, atol=2e-3, rtol=2e-3)

    print("KERNEL_OK")
</pallas_src>

<mosaic_0001>
module attributes {stable_mosaic.version = 11 : i64} {
  func.func @dynamics_kernel(%arg0: i32, %arg1: i32, %arg2: memref<8x16xf32, #tpu.memory_space<vmem>>, %arg3: memref<8x8xf32, #tpu.memory_space<vmem>>, %arg4: memref<1x24x400xbf16, #tpu.memory_space<vmem>>, %arg5: memref<1x400x400xbf16, #tpu.memory_space<vmem>>, %arg6: memref<1x400x16xbf16, #tpu.memory_space<vmem>>, %arg7: memref<1x7x400xf32, #tpu.memory_space<vmem>>, %arg8: memref<1x8x128xf32, #tpu.memory_space<vmem>>) attributes {dimension_semantics = [#tpu.dimension_semantics<parallel>, #tpu.dimension_semantics<parallel>], iteration_bounds = array<i64: 2, 1>, scalar_prefetch = 0 : i64, scratch_operands = 0 : i64, tpu.core_type = #tpu.core_type<tc>, window_params = [{transform_indices = @transform_0, window_bounds = array<i64: 8, 16>}, {transform_indices = @transform_1, window_bounds = array<i64: 8, 8>}, {transform_indices = @transform_2, window_bounds = array<i64: 1, 24, 400>}, {transform_indices = @transform_3, window_bounds = array<i64: 1, 400, 400>}, {transform_indices = @transform_4, window_bounds = array<i64: 1, 400, 16>}, {transform_indices = @transform_5, window_bounds = array<i64: 1, 7, 400>}, {transform_indices = @transform_6, window_bounds = array<i64: 1, 8, 128>}]} {
    %c0 = arith.constant 0 : index
    %c0_0 = arith.constant 0 : index
    %0 = vector.load %arg2[%c0, %c0_0] : memref<8x16xf32, #tpu.memory_space<vmem>>, vector<8x16xf32>
    %c0_1 = arith.constant 0 : index
    %c0_2 = arith.constant 0 : index
    %1 = vector.load %arg3[%c0_1, %c0_2] : memref<8x8xf32, #tpu.memory_space<vmem>>, vector<8x8xf32>
    %2 = tpu.concatenate %0, %1 in 1 : vector<8x16xf32>, vector<8x8xf32> -> vector<8x24xf32>
    %3 = arith.truncf %2 : vector<8x24xf32> to vector<8x24xbf16>
    %c0_3 = arith.constant 0 : index
    %c0_4 = arith.constant 0 : index
    %c0_5 = arith.constant 0 : index
    %4 = vector.load %arg7[%c0_3, %c0_4, %c0_5] : memref<1x7x400xf32, #tpu.memory_space<vmem>>, vector<1x1x400xf32>
    %5 = vector.shape_cast %4 : vector<1x1x400xf32> to vector<1x400xf32>
    %c0_6 = arith.constant 0 : index
    %c1 = arith.constant 1 : index
    %c0_7 = arith.constant 0 : index
    %6 = vector.load %arg7[%c0_6, %c1, %c0_7] : memref<1x7x400xf32, #tpu.memory_space<vmem>>, vector<1x1x400xf32>
    %7 = vector.shape_cast %6 : vector<1x1x400xf32> to vector<1x400xf32>
    %c0_8 = arith.constant 0 : index
    %c2 = arith.constant 2 : index
    %c0_9 = arith.constant 0 : index
    %8 = vector.load %arg7[%c0_8, %c2, %c0_9] : memref<1x7x400xf32, #tpu.memory_space<vmem>>, vector<1x1x400xf32>
    %9 = vector.shape_cast %8 : vector<1x1x400xf32> to vector<1x400xf32>
    %c0_10 = arith.constant 0 : index
    %c3 = arith.constant 3 : index
    %c0_11 = arith.constant 0 : index
    %10 = vector.load %arg7[%c0_10, %c3, %c0_11] : memref<1x7x400xf32, #tpu.memory_space<vmem>>, vector<1x1x400xf32>
    %11 = vector.shape_cast %10 : vector<1x1x400xf32> to vector<1x400xf32>
    %c0_12 = arith.constant 0 : index
    %c4 = arith.constant 4 : index
    %c0_13 = arith.constant 0 : index
    %12 = vector.load %arg7[%c0_12, %c4, %c0_13] : memref<1x7x400xf32, #tpu.memory_space<vmem>>, vector<1x1x400xf32>
    %13 = vector.shape_cast %12 : vector<1x1x400xf32> to vector<1x400xf32>
    %c0_14 = arith.constant 0 : index
    %c5 = arith.constant 5 : index
    %c0_15 = arith.constant 0 : index
    %14 = vector.load %arg7[%c0_14, %c5, %c0_15] : memref<1x7x400xf32, #tpu.memory_space<vmem>>, vector<1x1x400xf32>
    %15 = vector.shape_cast %14 : vector<1x1x400xf32> to vector<1x400xf32>
    %c0_16 = arith.constant 0 : index
    %c6 = arith.constant 6 : index
    %c0_17 = arith.constant 0 : index
    %16 = vector.load %arg7[%c0_16, %c6, %c0_17] : memref<1x7x400xf32, #tpu.memory_space<vmem>>, vector<1x1x16xf32>
    %17 = vector.shape_cast %16 : vector<1x1x16xf32> to vector<1x16xf32>
    %c0_18 = arith.constant 0 : index
    %c0_19 = arith.constant 0 : index
    %c0_20 = arith.constant 0 : index
    %18 = vector.load %arg4[%c0_18, %c0_19, %c0_20] : memref<1x24x400xbf16, #tpu.memory_space<vmem>>, vector<1x24x400xbf16>
    %19 = vector.shape_cast %18 : vector<1x24x400xbf16> to vector<24x400xbf16>
    %cst = arith.constant dense<0.000000e+00> : vector<8x400xf32>
    %20 = tpu.matmul %3, %19, %cst {dimension_numbers = #tpu.dot_dimension_numbers<[1], [0], [0], [1], [0, 0, 1, 1], [], []>} : vector<8x24xbf16>, vector<24x400xbf16>, vector<8x400xf32> -> vector<8x400xf32>
    %21 = vector.broadcast %5 : vector<1x400xf32> to vector<8x400xf32>
    %22 = arith.addf %20, %21 : vector<8x400xf32>
    %cst_21 = arith.constant 0.000000e+00 : f32
    %23 = vector.broadcast %cst_21 : f32 to vector<8x400xf32>
    %24 = arith.maximumf %22, %23 : vector<8x400xf32>
    %cst_22 = arith.constant dense<0.000000e+00> : vector<8xf32>
    %25 = vector.multi_reduction <add>, %24, %cst_22 [1] : vector<8x400xf32> to vector<8xf32>
    %26 = vector.shape_cast %25 : vector<8xf32> to vector<8x1xf32>
    %cst_23 = arith.constant 2.500000e-03 : f32
    %27 = vector.broadcast %cst_23 : f32 to vector<8x1xf32>
    %28 = arith.mulf %26, %27 : vector<8x1xf32>
    %29 = arith.mulf %24, %24 : vector<8x400xf32>
    %cst_24 = arith.constant dense<0.000000e+00> : vector<8xf32>
    %30 = vector.multi_reduction <add>, %29, %cst_24 [1] : vector<8x400xf32> to vector<8xf32>
    %31 = vector.shape_cast %30 : vector<8xf32> to vector<8x1xf32>
    %cst_25 = arith.constant 2.500000e-03 : f32
    %32 = vector.broadcast %cst_25 : f32 to vector<8x1xf32>
    %33 = arith.mulf %31, %32 : vector<8x1xf32>
    %34 = arith.mulf %28, %28 : vector<8x1xf32>
    %35 = arith.subf %33, %34 : vector<8x1xf32>
    %36 = vector.broadcast %28 : vector<8x1xf32> to vector<8x400xf32>
    %37 = arith.subf %24, %36 : vector<8x400xf32>
    %cst_26 = arith.constant 9.99999974E-6 : f32
    %38 = vector.broadcast %cst_26 : f32 to vector<8x1xf32>
    %39 = arith.addf %35, %38 : vector<8x1xf32>
    %40 = math.rsqrt %39 : vector<8x1xf32>
    %41 = vector.broadcast %40 : vector<8x1xf32> to vector<8x400xf32>
    %42 = arith.mulf %37, %41 : vector<8x400xf32>
    %43 = vector.broadcast %7 : vector<1x400xf32> to vector<8x400xf32>
    %44 = arith.mulf %42, %43 : vector<8x400xf32>
    %45 = vector.broadcast %9 : vector<1x400xf32> to vector<8x400xf32>
    %46 = arith.addf %44, %45 : vector<8x400xf32>
    %47 = arith.truncf %46 : vector<8x400xf32> to vector<8x400xbf16>
    %c0_27 = arith.constant 0 : index
    %c0_28 = arith.constant 0 : index
    %c0_29 = arith.constant 0 : index
    %48 = vector.load %arg5[%c0_27, %c0_28, %c0_29] : memref<1x400x400xbf16, #tpu.memory_space<vmem>>, vector<1x400x400xbf16>
    %49 = vector.shape_cast %48 : vector<1x400x400xbf16> to vector<400x400xbf16>
    %cst_30 = arith.constant dense<0.000000e+00> : vector<8x400xf32>
    %50 = tpu.matmul %47, %49, %cst_30 {dimension_numbers = #tpu.dot_dimension_numbers<[1], [0], [0], [1], [0, 0, 1, 1], [], []>} : vector<8x400xbf16>, vector<400x400xbf16>, vector<8x400xf32> -> vector<8x400xf32>
    %51 = vector.broadcast %11 : vector<1x400xf32> to vector<8x400xf32>
    %52 = arith.addf %50, %51 : vector<8x400xf32>
    %cst_31 = arith.constant 0.000000e+00 : f32
    %53 = vector.broadcast %cst_31 : f32 to vector<8x400xf32>
    %54 = arith.maximumf %52, %53 : vector<8x400xf32>
    %cst_32 = arith.constant dense<0.000000e+00> : vector<8xf32>
    %55 = vector.multi_reduction <add>, %54, %cst_32 [1] : vector<8x400xf32> to vector<8xf32>
    %56 = vector.shape_cast %55 : vector<8xf32> to vector<8x1xf32>
    %cst_33 = arith.constant 2.500000e-03 : f32
    %57 = vector.broadcast %cst_33 : f32 to vector<8x1xf32>
    %58 = arith.mulf %56, %57 : vector<8x1xf32>
    %59 = arith.mulf %54, %54 : vector<8x400xf32>
    %cst_34 = arith.constant dense<0.000000e+00> : vector<8xf32>
    %60 = vector.multi_reduction <add>, %59, %cst_34 [1] : vector<8x400xf32> to vector<8xf32>
    %61 = vector.shape_cast %60 : vector<8xf32> to vector<8x1xf32>
    %cst_35 = arith.constant 2.500000e-03 : f32
    %62 = vector.broadcast %cst_35 : f32 to vector<8x1xf32>
    %63 = arith.mulf %61, %62 : vector<8x1xf32>
    %64 = arith.mulf %58, %58 : vector<8x1xf32>
    %65 = arith.subf %63, %64 : vector<8x1xf32>
    %66 = vector.broadcast %58 : vector<8x1xf32> to vector<8x400xf32>
    %67 = arith.subf %54, %66 : vector<8x400xf32>
    %cst_36 = arith.constant 9.99999974E-6 : f32
    %68 = vector.broadcast %cst_36 : f32 to vector<8x1xf32>
    %69 = arith.addf %65, %68 : vector<8x1xf32>
    %70 = math.rsqrt %69 : vector<8x1xf32>
    %71 = vector.broadcast %70 : vector<8x1xf32> to vector<8x400xf32>
    %72 = arith.mulf %67, %71 : vector<8x400xf32>
    %73 = vector.broadcast %13 : vector<1x400xf32> to vector<8x400xf32>
    %74 = arith.mulf %72, %73 : vector<8x400xf32>
    %75 = vector.broadcast %15 : vector<1x400xf32> to vector<8x400xf32>
    %76 = arith.addf %74, %75 : vector<8x400xf32>
    %77 = arith.truncf %76 : vector<8x400xf32> to vector<8x400xbf16>
    %c0_37 = arith.constant 0 : index
    %c0_38 = arith.constant 0 : index
    %c0_39 = arith.constant 0 : index
    %78 = vector.load %arg6[%c0_37, %c0_38, %c0_39] : memref<1x400x16xbf16, #tpu.memory_space<vmem>>, vector<1x400x16xbf16>
    %79 = vector.shape_cast %78 : vector<1x400x16xbf16> to vector<400x16xbf16>
    %cst_40 = arith.constant dense<0.000000e+00> : vector<8x16xf32>
    %80 = tpu.matmul %77, %79, %cst_40 {dimension_numbers = #tpu.dot_dimension_numbers<[1], [0], [0], [1], [0, 0, 1, 1], [], []>} : vector<8x400xbf16>, vector<400x16xbf16>, vector<8x16xf32> -> vector<8x16xf32>
    %81 = vector.broadcast %17 : vector<1x16xf32> to vector<8x16xf32>
    %82 = arith.addf %80, %81 : vector<8x16xf32>
    %cst_41 = arith.constant 0.000000e+00 : f32
    %83 = vector.broadcast %cst_41 : f32 to vector<8x128xf32>
    %c0_42 = arith.constant 0 : index
    %c0_43 = arith.constant 0 : index
    %c0_44 = arith.constant 0 : index
    %84 = vector.load %arg8[%c0_42, %c0_43, %c0_44] : memref<1x8x128xf32, #tpu.memory_space<vmem>>, vector<1x8x128xf32>
    %85 = vector.shape_cast %84 : vector<1x8x128xf32> to vector<8x128xf32>
    %86 = vector.shape_cast %83 : vector<8x128xf32> to vector<1x8x128xf32>
    tpu.vector_store %arg8[%c0_42, %c0_43, %c0_44], %86 {strides = array<i32>} : memref<1x8x128xf32, #tpu.memory_space<vmem>>, vector<1x8x128xf32>,
    %c0_i32 = arith.constant 0 : i32
    %87 = arith.cmpi eq, %arg0, %c0_i32 : i32
    %88 = arith.extui %87 : i1 to i32
    %c0_i32_45 = arith.constant 0 : i32
    %89 = arith.cmpi ne, %88, %c0_i32_45 : i32
    scf.if %89 {
      %c0_47 = arith.constant 0 : index
      %c0_48 = arith.constant 0 : index
      %c0_49 = arith.constant 0 : index
      %93 = vector.load %arg8[%c0_47, %c0_48, %c0_49] : memref<1x8x128xf32, #tpu.memory_space<vmem>>, vector<1x8x16xf32>
      %94 = vector.shape_cast %93 : vector<1x8x16xf32> to vector<8x16xf32>
      %95 = vector.shape_cast %82 : vector<8x16xf32> to vector<1x8x16xf32>
      tpu.vector_store %arg8[%c0_47, %c0_48, %c0_49], %95 {strides = array<i32>} : memref<1x8x128xf32, #tpu.memory_space<vmem>>, vector<1x8x16xf32>,
    } else {
    }
    %c1_i32 = arith.constant 1 : i32
    %90 = arith.cmpi eq, %arg0, %c1_i32 : i32
    %91 = arith.extui %90 : i1 to i32
    %c0_i32_46 = arith.constant 0 : i32
    %92 = arith.cmpi ne, %91, %c0_i32_46 : i32
    scf.if %92 {
      %cst_47 = arith.constant -13.8155107 : f32
      %cst_48 = arith.constant 13.8155107 : f32
      %93 = vector.broadcast %cst_47 : f32 to vector<8x16xf32>
      %94 = arith.maximumf %93, %82 : vector<8x16xf32>
      %95 = vector.broadcast %cst_48 : f32 to vector<8x16xf32>
      %96 = arith.minimumf %95, %94 : vector<8x16xf32>
      %97 = math.exp %96 : vector<8x16xf32>
      %c0_49 = arith.constant 0 : index
      %c0_50 = arith.constant 0 : index
      %c0_51 = arith.constant 0 : index
      %98 = vector.load %arg8[%c0_49, %c0_50, %c0_51] : memref<1x8x128xf32, #tpu.memory_space<vmem>>, vector<1x8x16xf32>
      %99 = vector.shape_cast %98 : vector<1x8x16xf32> to vector<8x16xf32>
      %100 = vector.shape_cast %97 : vector<8x16xf32> to vector<1x8x16xf32>
      tpu.vector_store %arg8[%c0_49, %c0_50, %c0_51], %100 {strides = array<i32>} : memref<1x8x128xf32, #tpu.memory_space<vmem>>, vector<1x8x16xf32>,
    } else {
    }
    return
  }
  func.func @transform_0(%arg0: i32, %arg1: i32) -> (i32, i32) {
    %c0_i32 = arith.constant 0 : i32
    %c0_i32_0 = arith.constant 0 : i32
    return %arg1, %c0_i32 : i32, i32
  }
  func.func @transform_1(%arg0: i32, %arg1: i32) -> (i32, i32) {
    %c0_i32 = arith.constant 0 : i32
    %c0_i32_0 = arith.constant 0 : i32
    return %arg1, %c0_i32 : i32, i32
  }
  func.func @transform_2(%arg0: i32, %arg1: i32) -> (i32, i32, i32) {
    %c0_i32 = arith.constant 0 : i32
    %c0_i32_0 = arith.constant 0 : i32
    %c0_i32_1 = arith.constant 0 : i32
    return %arg0, %c0_i32, %c0_i32_0 : i32, i32, i32
  }
  func.func @transform_3(%arg0: i32, %arg1: i32) -> (i32, i32, i32) {
    %c0_i32 = arith.constant 0 : i32
    %c0_i32_0 = arith.constant 0 : i32
    %c0_i32_1 = arith.constant 0 : i32
    return %arg0, %c0_i32, %c0_i32_0 : i32, i32, i32
  }
  func.func @transform_4(%arg0: i32, %arg1: i32) -> (i32, i32, i32) {
    %c0_i32 = arith.constant 0 : i32
    %c0_i32_0 = arith.constant 0 : i32
    %c0_i32_1 = arith.constant 0 : i32
    return %arg0, %c0_i32, %c0_i32_0 : i32, i32, i32
  }
  func.func @transform_5(%arg0: i32, %arg1: i32) -> (i32, i32, i32) {
    %c0_i32 = arith.constant 0 : i32
    %c0_i32_0 = arith.constant 0 : i32
    %c0_i32_1 = arith.constant 0 : i32
    return %arg0, %c0_i32, %c0_i32_0 : i32, i32, i32
  }
  func.func @transform_6(%arg0: i32, %arg1: i32) -> (i32, i32, i32) {
    %c0_i32 = arith.constant 0 : i32
    %c0_i32_0 = arith.constant 0 : i32
    return %arg0, %arg1, %c0_i32 : i32, i32, i32
  }
}

</mosaic_0001>

<llo_original>
// kernel: tpu_custom_call.1
$region0: #{tpu_custom_call.1}
  #allocation0 [shape = 'u32[]', space=smem, size = 0x4, offset = 0x4, fixed_abs, tag = 'smem constant byte address 0x4 - core index']
  #allocation1 [shape = 'u32[72,128]{1,0:T(1,128)}', space=vmem, size = 0x9000, scoped, tag = 'internal scratch']
  %s0 = inlined_call_operand.vmem [shape: f32[8,16], index: 0, kind: input, shape index: {}]
  %s1 = inlined_call_operand.vmem [shape: f32[8,8], index: 1, kind: input, shape index: {}]
  %s2 = inlined_call_operand.vmem [shape: bf16[2,24,400], index: 2, kind: input, shape index: {}]
  %s3 = inlined_call_operand.hbm [shape: bf16[2,400,400], index: 3, kind: input, shape index: {}]
  %s4 = inlined_call_operand.vmem [shape: bf16[2,400,16], index: 4, kind: input, shape index: {}]
  %s5 = inlined_call_operand.vmem [shape: f32[2,7,400], index: 5, kind: input, shape index: {}]
  %s6 = inlined_call_operand.hbm [shape: f32[2,8,128], index: 6, kind: output, shape index: {}]
  %s7 = sld [smem:[#allocation0]]
  $region69: #{tpu_custom_call.1} parent=0
    _
  %s9 = ssub.s32 1, %s7
  %s10 = scalar_select 0, %s9, %s7
  $region1: #{tpu_custom_call.1} parent=0
    #allocation2 [shape = 'u8[819200]{0}', space=vmem, size = 0xc8000, scoped, tag = 'input window, operand 3']
    #allocation3 [shape = 's32[2]{0}', space=sflag, size = 0x8, scoped, tag = 'scoped memory for tpu_custom_call.1']
    #allocation4 [shape = 's32[2]{0}', space=sflag, size = 0x8, scoped, tag = 'scoped memory for tpu_custom_call.1']
    #allocation5 [shape = 'u8[8192]{0}', space=vmem, size = 0x2000, scoped, tag = 'output window, operand 0']
    %11 = vsyncpa [#allocation3], 0
    %s12 = scalar_lea.sflag [#allocation3], 1
    %13 = vsyncpa %s12, 0
    %14 = vsyncpa [#allocation4], 0
    %s15 = scalar_lea.sflag [#allocation4], 1
    %16 = vsyncpa %s15, 0
    loop: start=0, step=1, limit=4
    $region2: #{tpu_custom_call.1} parent=1 // loop_pre_header
      _
    $region3: #{tpu_custom_call.1} parent=1 // loop_header
      %s18 = sphi 0, %s22
      %p19 = scmp.ge.s32.totalorder %s18, 4
      %s25 = sphi 0, %s37
      %s26 = sphi 0, %s33
      %s27 = sphi 0, %s25
      %s28 = sphi 0, %s26
      %s29 = sphi 0, %s27
      %s30 = sphi 0, %s28
      %s40 = sphi 0, %s42
      %s43 = sphi 0, %s40
      %s44 = sphi 0, %s43
      %s60 = sphi 0, %s44
      %s66 = sphi 0, %s68
      %s69 = sphi 0, %s66
      %s70 = sphi 0, %s69
      %s86 = sphi 0, %s70
      %s92 = sphi 0, %s94
      %s95 = sphi 0, %s92
      %s96 = sphi 0, %s95
      %s112 = sphi 0, %s96
      %s118 = sphi 0, %s120
      %s121 = sphi 0, %s118
      %s122 = sphi 0, %s121
      %s138 = sphi 0, %s122
      %s144 = sphi 0, %s146
      %s147 = sphi 0, %s144
      %s148 = sphi 0, %s147
      %s164 = sphi 0, %s148
      %s170 = sphi 0, %s172
      %s173 = sphi 0, %s170
      %s174 = sphi 0, %s173
      %s190 = sphi 0, %s174
      %s198 = sphi 0, %s200
      %s201 = sphi 0, %s198
      %s202 = sphi 0, %s201
      %s218 = sphi 0, %s202
    $region4: #{tpu_custom_call.1} parent=1 // loop_header_branch
      %21 = sbr.rel (%p19) target = $region8
    $region5: #{tpu_custom_call.1} parent=1 // loop_body
      %s23 = ssub.s32 %s18, 1
      %s24 = ssub.s32 %s18, 2
      %s31 = sadd.s32 1, %s26
      %p32 = scmp.ge.s32.totalorder %s31, 1
      %s33 = scalar_select %p32, 0, %s31
      %s34 = sadd.s32 1, %s25
      %s35 = scalar_select %p32, %s34, %s25
      %p36 = scmp.ge.s32.totalorder %s35, 2
      %s37 = scalar_select %p36, 0, %s35
      %s38 = ssub.s32 %s26, %s33
      %p39 = scmp.eq.s32.totalorder %s38, 0
      %s41 = sadd.s32 %s40, 1
      %s42 = scalar_select %p39, %s40, %s41
      %p45 = pneg %p39
      %p46 = scmp.eq.s32.totalorder %s18, 1
      %p47 = por %p45, %p46
      %p48 = scmp.ne.s32.totalorder %s40, %s43
      %p49 = scmp.eq.s32.totalorder %s18, 0
      %p50 = por %p48, %p49
      %p51 = scmp.ne.s32.totalorder %s40, %s43
      %p52 = scmp.eq.s32.totalorder %s23, 1
      %p53 = por %p51, %p52
      %p54 = scmp.ne.s32.totalorder %s43, %s44
      %p55 = scmp.eq.s32.totalorder %s23, 0
      %p56 = por %p54, %p55
      %p57 = scmp.ne.s32.totalorder %s43, %s44
      %p58 = scmp.eq.s32.totalorder %s24, 1
      %p59 = por %p57, %p58
      %p61 = scmp.ne.s32.totalorder %s44, %s60
      %p62 = scmp.eq.s32.totalorder %s24, 0
      %p63 = por %p61, %p62
      %s64 = ssub.s32 %s26, %s33
      %p65 = scmp.eq.s32.totalorder %s64, 0
      %s67 = sadd.s32 %s66, 1
      %s68 = scalar_select %p65, %s66, %s67
      %p71 = pneg %p65
      %p72 = scmp.eq.s32.totalorder %s18, 1
      %p73 = por %p71, %p72
      %p74 = scmp.ne.s32.totalorder %s66, %s69
      %p75 = scmp.eq.s32.totalorder %s18, 0
      %p76 = por %p74, %p75
      %p77 = scmp.ne.s32.totalorder %s66, %s69
      %p78 = scmp.eq.s32.totalorder %s23, 1
      %p79 = por %p77, %p78
      %p80 = scmp.ne.s32.totalorder %s69, %s70
      %p81 = scmp.eq.s32.totalorder %s23, 0
      %p82 = por %p80, %p81
      %p83 = scmp.ne.s32.totalorder %s69, %s70
      %p84 = scmp.eq.s32.totalorder %s24, 1
      %p85 = por %p83, %p84
      %p87 = scmp.ne.s32.totalorder %s70, %s86
      %p88 = scmp.eq.s32.totalorder %s24, 0
      %p89 = por %p87, %p88
      %s90 = ssub.s32 %s25, %s37
      %p91 = scmp.eq.s32.totalorder %s90, 0
      %s93 = sadd.s32 %s92, 1
      %s94 = scalar_select %p91, %s92, %s93
      %p97 = pneg %p91
      %p98 = scmp.eq.s32.totalorder %s18, 1
      %p99 = por %p97, %p98
      %p100 = scmp.ne.s32.totalorder %s92, %s95
      %p101 = scmp.eq.s32.totalorder %s18, 0
      %p102 = por %p100, %p101
      %p103 = scmp.ne.s32.totalorder %s92, %s95
      %p104 = scmp.eq.s32.totalorder %s23, 1
      %p105 = por %p103, %p104
      %p106 = scmp.ne.s32.totalorder %s95, %s96
      %p107 = scmp.eq.s32.totalorder %s23, 0
      %p108 = por %p106, %p107
      %p109 = scmp.ne.s32.totalorder %s95, %s96
      %p110 = scmp.eq.s32.totalorder %s24, 1
      %p111 = por %p109, %p110
      %p113 = scmp.ne.s32.totalorder %s96, %s112
      %p114 = scmp.eq.s32.totalorder %s24, 0
      %p115 = por %p113, %p114
      %s116 = ssub.s32 %s25, %s37
      %p117 = scmp.eq.s32.totalorder %s116, 0
      %s119 = sadd.s32 %s118, 1
      %s120 = scalar_select %p117, %s118, %s119
      %p123 = pneg %p117
      %p124 = scmp.eq.s32.totalorder %s18, 1
      %p125 = por %p123, %p124
      %p126 = scmp.ne.s32.totalorder %s118, %s121
      %p127 = scmp.eq.s32.totalorder %s18, 0
      %p128 = por %p126, %p127
      %p129 = scmp.ne.s32.totalorder %s118, %s121
      %p130 = scmp.eq.s32.totalorder %s23, 1
      %p131 = por %p129, %p130
      %p132 = scmp.ne.s32.totalorder %s121, %s122
      %p133 = scmp.eq.s32.totalorder %s23, 0
      %p134 = por %p132, %p133
      %p135 = scmp.ne.s32.totalorder %s121, %s122
      %p136 = scmp.eq.s32.totalorder %s24, 1
      %p137 = por %p135, %p136
      %p139 = scmp.ne.s32.totalorder %s122, %s138
      %p140 = scmp.eq.s32.totalorder %s24, 0
      %p141 = por %p139, %p140
      %s142 = ssub.s32 %s25, %s37
      %p143 = scmp.eq.s32.totalorder %s142, 0
      %s145 = sadd.s32 %s144, 1
      %s146 = scalar_select %p143, %s144, %s145
      %p149 = pneg %p143
      %p150 = scmp.eq.s32.totalorder %s18, 1
      %p151 = por %p149, %p150
      %p152 = scmp.ne.s32.totalorder %s144, %s147
      %p153 = scmp.eq.s32.totalorder %s18, 0
      %p154 = por %p152, %p153
      %p155 = scmp.ne.s32.totalorder %s144, %s147
      %p156 = scmp.eq.s32.totalorder %s23, 1
      %p157 = por %p155, %p156
      %p158 = scmp.ne.s32.totalorder %s147, %s148
      %p159 = scmp.eq.s32.totalorder %s23, 0
      %p160 = por %p158, %p159
      %p161 = scmp.ne.s32.totalorder %s147, %s148
      %p162 = scmp.eq.s32.totalorder %s24, 1
      %p163 = por %p161, %p162
      %p165 = scmp.ne.s32.totalorder %s148, %s164
      %p166 = scmp.eq.s32.totalorder %s24, 0
      %p167 = por %p165, %p166
      %s168 = ssub.s32 %s25, %s37
      %p169 = scmp.eq.s32.totalorder %s168, 0
      %s171 = sadd.s32 %s170, 1
      %s172 = scalar_select %p169, %s170, %s171
      %p175 = pneg %p169
      %p176 = scmp.eq.s32.totalorder %s18, 1
      %p177 = por %p175, %p176
      %p178 = scmp.ne.s32.totalorder %s170, %s173
      %p179 = scmp.eq.s32.totalorder %s18, 0
      %p180 = por %p178, %p179
      %p181 = scmp.ne.s32.totalorder %s170, %s173
      %p182 = scmp.eq.s32.totalorder %s23, 1
      %p183 = por %p181, %p182
      %p184 = scmp.ne.s32.totalorder %s173, %s174
      %p185 = scmp.eq.s32.totalorder %s23, 0
      %p186 = por %p184, %p185
      %p187 = scmp.ne.s32.totalorder %s173, %s174
      %p188 = scmp.eq.s32.totalorder %s24, 1
      %p189 = por %p187, %p188
      %p191 = scmp.ne.s32.totalorder %s174, %s190
      %p192 = scmp.eq.s32.totalorder %s24, 0
      %p193 = por %p191, %p192
      %s194 = ssub.s32 %s25, %s37
      %s195 = ssub.s32 %s26, %s33
      %s196 = sor.u32 %s194, %s195
      %p197 = scmp.eq.s32.totalorder %s196, 0
      %s199 = sadd.s32 %s198, 1
      %s200 = scalar_select %p197, %s198, %s199
      %p203 = pneg %p197
      %p204 = scmp.eq.s32.totalorder %s18, 1
      %p205 = por %p203, %p204
      %p206 = scmp.ne.s32.totalorder %s198, %s201
      %p207 = scmp.eq.s32.totalorder %s18, 0
      %p208 = por %p206, %p207
      %p209 = scmp.ne.s32.totalorder %s198, %s201
      %p210 = scmp.eq.s32.totalorder %s23, 1
      %p211 = por %p209, %p210
      %p212 = scmp.ne.s32.totalorder %s201, %s202
      %p213 = scmp.eq.s32.totalorder %s23, 0
      %p214 = por %p212, %p213
      %p215 = scmp.ne.s32.totalorder %s201, %s202
      %p216 = scmp.eq.s32.totalorder %s24, 1
      %p217 = por %p215, %p216
      %p219 = scmp.ne.s32.totalorder %s202, %s218
      %p220 = scmp.eq.s32.totalorder %s24, 0
      %p221 = por %p219, %p220
      %p222 = scmp.le.s32.totalorder 1, %s18
      %p223 = scmp.lt.s32.totalorder %s18, 3
      %p224 = pnand %p222, %p223
      %p225 = pneg %p224
      // Predicated region
      $region9: #{tpu_custom_call.1} parent=5 // pred_check
        _
      $region10: #{tpu_custom_call.1} parent=5 // pred_check_branch
        %227 = sbr.rel (%p224) target = $region12
      $region11: #{tpu_custom_call.1} parent=5 // pred_region
        %s228 = ssub.s32 %s18, 1
        // Predicated region
        $region13: #{tpu_custom_call.1} parent=11 // pred_check
          %p229 = pneg %p56
        $region14: #{tpu_custom_call.1} parent=11 // pred_check_branch
          %231 = sbr.rel (%p229) target = $region16
        $region15: #{tpu_custom_call.1} parent=11 // pred_region
          %p232 = scmp.lt.s32.totalorder %s28, 0
          %s233 = scalar_select %p232, %s28, 0
          %s234 = smul.addr %s233, 8
          %s235 = scalar_lea.vmem %s0, %s234
        $region16: #{tpu_custom_call.1} parent=11 // pred_fallthru
          _
        // Predicated region
        $region17: #{tpu_custom_call.1} parent=11 // pred_check
          %p236 = pneg %p82
        $region18: #{tpu_custom_call.1} parent=11 // pred_check_branch
          %238 = sbr.rel (%p236) target = $region20
        $region19: #{tpu_custom_call.1} parent=11 // pred_region
          %p239 = scmp.lt.s32.totalorder %s28, 0
          %s240 = scalar_select %p239, %s28, 0
          %s241 = smul.addr %s240, 8
          %s242 = scalar_lea.vmem %s1, %s241
        $region20: #{tpu_custom_call.1} parent=11 // pred_fallthru
          _
      $region12: #{tpu_custom_call.1} parent=5 // pred_fallthru
        _
      %p243 = scmp.lt.s32.totalorder %s18, 2
      // Predicated region
      $region21: #{tpu_custom_call.1} parent=5 // pred_check
        %p244 = pneg %p243
      $region22: #{tpu_custom_call.1} parent=5 // pred_check_branch
        %246 = sbr.rel (%p244) target = $region24
      $region23: #{tpu_custom_call.1} parent=5 // pred_region
        // Predicated region
        $region25: #{tpu_custom_call.1} parent=23 // pred_check
          %p247 = pneg %p102
        $region26: #{tpu_custom_call.1} parent=23 // pred_check_branch
          %249 = sbr.rel (%p247) target = $region28
        $region27: #{tpu_custom_call.1} parent=23 // pred_region
          %p250 = scmp.lt.s32.totalorder %s25, 1
          %s251 = scalar_select %p250, %s25, 1
          %s252 = smul.addr %s251, 12
          %s253 = smul.addr %s252, 4
          %s254 = scalar_lea.vmem %s2, %s253
        $region28: #{tpu_custom_call.1} parent=23 // pred_fallthru
          _
        // Predicated region
        $region29: #{tpu_custom_call.1} parent=23 // pred_check
          %p255 = pneg %p128
        $region30: #{tpu_custom_call.1} parent=23 // pred_check_branch
          %257 = sbr.rel (%p255) target = $region32
        $region31: #{tpu_custom_call.1} parent=23 // pred_region
          %s258 = sand.u32 %s118, 1
          %s259 = scalar_lea.sflag [#allocation3], %s258
          %s260 = sand.u32 %s118, 1
          %s261 = smul.addr %s260, 800
          %s262 = scalar_lea.vmem [#allocation2], %s261
          %264 = vsyncadd %s259, 0
          %s265 = smul.addr %s25, 200
          %s266 = smul.addr %s265, 4
          %s267 = scalar_lea.hbm %s3, %s266
          %s268 = sshll.u32 %s267, 4
          %s269 = int_to_ptr.hbm [resolvable:$true] %s268
          %s270 = sshll.u32 %s262, 4
          %s271 = int_to_ptr.vmem [resolvable:$true] %s270
          %276 = dma.hbm_to_vmem [thread:$0]  %s269, 12800, %s271, %s259, 256, 256, 16
        $region32: #{tpu_custom_call.1} parent=23 // pred_fallthru
          _
        // Predicated region
        $region33: #{tpu_custom_call.1} parent=23 // pred_check
          %p277 = pneg %p154
        $region34: #{tpu_custom_call.1} parent=23 // pred_check_branch
          %279 = sbr.rel (%p277) target = $region36
        $region35: #{tpu_custom_call.1} parent=23 // pred_region
          %p280 = scmp.lt.s32.totalorder %s25, 1
          %s281 = scalar_select %p280, %s25, 1
          %s282 = smul.addr %s281, 50
          %s283 = smul.addr %s282, 4
          %s284 = scalar_lea.vmem %s4, %s283
        $region36: #{tpu_custom_call.1} parent=23 // pred_fallthru
          _
        // Predicated region
        $region37: #{tpu_custom_call.1} parent=23 // pred_check
          %p285 = pneg %p180
        $region38: #{tpu_custom_call.1} parent=23 // pred_check_branch
          %287 = sbr.rel (%p285) target = $region40
        $region39: #{tpu_custom_call.1} parent=23 // pred_region
          %p288 = scmp.lt.s32.totalorder %s25, 1
          %s289 = scalar_select %p288, %s25, 1
          %s290 = smul.addr %s289, 4
          %s291 = smul.addr %s290, 8
          %s292 = scalar_lea.vmem %s5, %s291
        $region40: #{tpu_custom_call.1} parent=23 // pred_fallthru
          _
      $region24: #{tpu_custom_call.1} parent=5 // pred_fallthru
        _
      %p293 = scmp.le.s32.totalorder 1, %s18
      %p294 = scmp.lt.s32.totalorder %s18, 3
      %p295 = pnand %p293, %p294
      %p296 = pneg %p295
      // Predicated region
      $region41: #{tpu_custom_call.1} parent=5 // pred_check
        _
      $region42: #{tpu_custom_call.1} parent=5 // pred_check_branch
        %298 = sbr.rel (%p295) target = $region44
      $region43: #{tpu_custom_call.1} parent=5 // pred_region
        %s299 = ssub.s32 %s18, 1
        %s300 = sand.u32 %s121, 1
        %s301 = scalar_lea.sflag [#allocation3], %s300
        %s302 = sand.u32 %s121, 1
        %s303 = smul.addr %s302, 800
        %s304 = scalar_lea.vmem [#allocation2], %s303
        // Predicated region
        $region45: #{tpu_custom_call.1} parent=43 // pred_check
          %p305 = pneg %p134
        $region46: #{tpu_custom_call.1} parent=43 // pred_check_branch
          %307 = sbr.rel (%p305) target = $region48
        $region47: #{tpu_custom_call.1} parent=43 // pred_region
          %309 = dma.done %s301, 12800
        $region48: #{tpu_custom_call.1} parent=43 // pred_fallthru
          _
        %p310 = scmp.lt.s32.totalorder %s28, 0
        %s311 = scalar_select %p310, %s28, 0
        %s312 = smul.addr %s311, 8
        %s313 = scalar_lea.vmem %s0, %s312
        %p314 = pneg %p56
        %p315 = pneg %p53
        %p316 = scmp.lt.s32.totalorder %s28, 0
        %s317 = scalar_select %p316, %s28, 0
        %s318 = smul.addr %s317, 8
        %s319 = scalar_lea.vmem %s1, %s318
        %p320 = pneg %p82
        %p321 = pneg %p79
        %p322 = scmp.lt.s32.totalorder %s27, 1
        %s323 = scalar_select %p322, %s27, 1
        %s324 = smul.addr %s323, 12
        %s325 = smul.addr %s324, 4
        %s326 = scalar_lea.vmem %s2, %s325
        %p327 = pneg %p108
        %p328 = pneg %p105
        %s329 = sand.u32 %s121, 1
        %s330 = scalar_lea.sflag [#allocation3], %s329
        %s331 = sand.u32 %s121, 1
        %s332 = smul.addr %s331, 800
        %s333 = scalar_lea.vmem [#allocation2], %s332
        %p334 = pneg %p134
        %p335 = pneg %p131
        %p336 = scmp.lt.s32.totalorder %s27, 1
        %s337 = scalar_select %p336, %s27, 1
        %s338 = smul.addr %s337, 50
        %s339 = smul.addr %s338, 4
        %s340 = scalar_lea.vmem %s4, %s339
        %p341 = pneg %p160
        %p342 = pneg %p157
        %p343 = scmp.lt.s32.totalorder %s27, 1
        %s344 = scalar_select %p343, %s27, 1
        %s345 = smul.addr %s344, 4
        %s346 = smul.addr %s345, 8
        %s347 = scalar_lea.vmem %s5, %s346
        %p348 = pneg %p186
        %p349 = pneg %p183
        %p350 = pneg %p214
        %p351 = pneg %p211
        %s352 = sand.u32 %s201, 1
        %s353 = scalar_lea.sflag [#allocation4], %s352
        %s354 = sand.u32 %s201, 1
        %s355 = smul.addr %s354, 8
        %s356 = scalar_lea.vmem [#allocation5], %s355
        %p357 = scmp.lt.s32.totalorder %s28, 0
        %s358 = scalar_select %p357, %s28, 0
        %s359 = smul.addr %s358, 8
        %s360 = scalar_lea.vmem %s0, %s359
        %p361 = scmp.lt.s32.totalorder %s28, 0
        %s362 = scalar_select %p361, %s28, 0
        %s363 = smul.addr %s362, 8
        %s364 = scalar_lea.vmem %s1, %s363
        %p365 = scmp.lt.s32.totalorder %s27, 1
        %s366 = scalar_select %p365, %s27, 1
        %s367 = smul.addr %s366, 12
        %s368 = smul.addr %s367, 4
        %s369 = scalar_lea.vmem %s2, %s368
        %p370 = scmp.lt.s32.totalorder %s27, 1
        %s371 = scalar_select %p370, %s27, 1
        %s372 = smul.addr %s371, 50
        %s373 = smul.addr %s372, 4
        %s374 = scalar_lea.vmem %s4, %s373
        %p375 = scmp.lt.s32.totalorder %s27, 1
        %s376 = scalar_select %p375, %s27, 1
        %s377 = smul.addr %s376, 4
        %s378 = smul.addr %s377, 8
        %s379 = scalar_lea.vmem %s5, %s378
        %v381 = vld [vmem:[%s360] sm:$0xff]
        %v382 = vld [vmem:[%s364] sm:$0xff]
        %384 = vrot.lane.b32.xlu0 %v382, 16
        %v385 = vpop.permute.xlu0 %384
        %vm387 = vcmask 130048
        %v388 = vsel %vm387, %v381, %v385
        %v389 = vpack.c.bf16 %v388, %v388
        %v390 = vld [vmem:[%s379] ss:$8 sm:$0xf]
        %s391 = scalar_lea.vmem %s379, 1
        %v392 = vld [vmem:[%s391] ss:$8 sm:$0xf]
        %s393 = scalar_lea.vmem %s379, 2
        %v394 = vld [vmem:[%s393] ss:$8 sm:$0xf]
        %s395 = scalar_lea.vmem %s379, 3
        %v396 = vld [vmem:[%s395] ss:$8 sm:$0xf]
        %s397 = scalar_lea.vmem %s379, 4
        %v398 = vld [vmem:[%s397] ss:$8 sm:$0xf]
        %s399 = scalar_lea.vmem %s379, 5
        %v400 = vld [vmem:[%s399] ss:$8 sm:$0xf]
        %v401 = vld [vmem:[%s379 + $0x6] ss:$0 sm:$0xff]
        %v402 = vld [vmem:[%s369] sm:$0xff]
        %v403 = vld [vmem:[%s369 + $0x8] sm:$0xff]
        %v404 = vld [vmem:[%s369 + $0x10] sm:$0xff]
        %v405 = vld [vmem:[%s369 + $0x18] sm:$0xff]
        %v406 = vld [vmem:[%s369 + $0x20] sm:$0xff]
        %v407 = vld [vmem:[%s369 + $0x28] sm:$0xff]
        %v409 = vperm.slane %v390, 0
        %v410 = vperm.slane %v390, 1
        %v411 = vperm.slane %v390, 2
        %v412 = vperm.slane %v390, 3
        %v423 = vunpack.c.l.b16 %v402
        %v424 = vunpack.c.h.b16 %v402
        %v425 = vunpack.c.l.b16 %v403
        %v426 = vunpack.c.h.b16 %v403
        %v427 = vunpack.c.l.b16 %v404
        %v428 = vunpack.c.h.b16 %v404
        %v429 = vunpack.c.l.b16 %v405
        %v430 = vunpack.c.h.b16 %v405
        %v431 = vunpack.c.l.b16 %v406
        %v432 = vunpack.c.h.b16 %v406
        %v433 = vunpack.c.l.b16 %v407
        %v434 = vunpack.c.h.b16 %v407
        %v435 = vpack.c.b16 %v427, %v423
        %v436 = vpack.c.b16 %v428, %v424
        %v437 = vpack.c.b16 %v429, %v425
        %v438 = vpack.c.b16 %v430, %v426
        %v439 = vpack.c.b16 %v431, %v431
        %v440 = vpack.c.b16 %v432, %v432
        %v441 = vpack.c.b16 %v433, %v433
        %v442 = vpack.c.b16 %v434, %v434
        %vm447 = vcmask 195584
        %v449 = vsel %vm447, %v389, 0
        %vm451 = vcmask 1043456
        %v453 = vsel %vm451, %v439, 0
        %v456 = vsel %vm451, %v440, 0
        %v459 = vsel %vm451, %v441, 0
        %v462 = vsel %vm451, %v442, 0
        %464 = vmatpush.bf16.msra.mxu0 0
        %465 = vmatpush.bf16.msra.mxu0 0
        %466 = vmatpush.bf16.msra.mxu0 0
        %467 = vmatpush.bf16.msra.mxu0 0
        %468 = vmatpush.bf16.msra.mxu0 0
        %469 = vmatpush.bf16.msra.mxu0 0
        %470 = vmatpush.bf16.msra.mxu0 %v453
        %471 = vmatpush.bf16.msra.mxu0 %v435
        %472 = vmatmul.bf16.gmra.mxu0 %v449
        %v473 = vpop.f32.mrf.mxu0
        %v474 = vadd.f32 %v409, %v473
        %v475 = vpop.f32.mrf.mxu0
        %476 = vdwg.mxu0
        %477 = vmatpush.bf16.msra.mxu0 0
        %478 = vmatpush.bf16.msra.mxu0 0
        %479 = vmatpush.bf16.msra.mxu0 0
        %480 = vmatpush.bf16.msra.mxu0 0
        %481 = vmatpush.bf16.msra.mxu0 0
        %482 = vmatpush.bf16.msra.mxu0 0
        %483 = vmatpush.bf16.msra.mxu0 %v456
        %484 = vmatpush.bf16.msra.mxu0 %v436
        %485 = vmatmul.bf16.gmra.mxu0 %v449
        %v486 = vpop.f32.mrf.mxu0
        %v487 = vadd.f32 %v410, %v486
        %v488 = vpop.f32.mrf.mxu0
        %489 = vdwg.mxu0
        %490 = vmatpush.bf16.msra.mxu0 0
        %491 = vmatpush.bf16.msra.mxu0 0
        %492 = vmatpush.bf16.msra.mxu0 0
        %493 = vmatpush.bf16.msra.mxu0 0
        %494 = vmatpush.bf16.msra.mxu0 0
        %495 = vmatpush.bf16.msra.mxu0 0
        %496 = vmatpush.bf16.msra.mxu0 %v459
        %497 = vmatpush.bf16.msra.mxu0 %v437
        %498 = vmatmul.bf16.gmra.mxu0 %v449
        %v499 = vpop.f32.mrf.mxu0
        %v500 = vadd.f32 %v411, %v499
        %v501 = vpop.f32.mrf.mxu0
        %502 = vdwg.mxu0
        %503 = vmatpush.bf16.msra.mxu0 0
        %504 = vmatpush.bf16.msra.mxu0 0
        %505 = vmatpush.bf16.msra.mxu0 0
        %506 = vmatpush.bf16.msra.mxu0 0
        %507 = vmatpush.bf16.msra.mxu0 0
        %508 = vmatpush.bf16.msra.mxu0 0
        %509 = vmatpush.bf16.msra.mxu0 %v462
        %510 = vmatpush.bf16.msra.mxu0 %v438
        %511 = vmatmul.bf16.gmra.mxu0 %v449
        %v512 = vpop.f32.mrf.mxu0
        %v513 = vadd.f32 %v412, %v512
        %v514 = vpop.f32.mrf.mxu0
        %515 = vdwg.mxu0
        %v516 = vmax.f32 %v474, 0.0
        %v517 = vmax.f32 %v487, 0.0
        %v518 = vmax.f32 %v500, 0.0
        %v519 = vmax.f32 %v513, 0.0
        %v520 = vadd.f32 %v516, %v517
        %v521 = vadd.f32 %v520, %v518
        %v522 = vsel %vm387, %v519, 0.0
        %v523 = vadd.f32 %v521, %v522
        %524 = vadd.xlane.f32.xlu0 %v523
        %v525 = vpop.xlane.xlu0 %524
        %v526 = vmul.f32 %v525, 0.0025
        %v527 = vmul.f32 %v516, %v516
        %v528 = vmul.f32 %v517, %v517
        %v529 = vmul.f32 %v518, %v518
        %v530 = vmul.f32 %v519, %v519
        %v531 = vadd.f32 %v527, %v528
        %v532 = vadd.f32 %v531, %v529
        %v533 = vsel %vm387, %v530, 0.0
        %v534 = vadd.f32 %v532, %v533
        %535 = vadd.xlane.f32.xlu0 %v534
        %v536 = vpop.xlane.xlu0 %535
        %v537 = vmul.f32 %v536, 0.0025
        %v538 = vmul.f32 %v526, %v526
        %v539 = vsub.f32 %v537, %v538
        %v540 = vsub.f32 %v516, %v526
        %v541 = vsub.f32 %v517, %v526
        %v542 = vsub.f32 %v518, %v526
        %v543 = vsub.f32 %v519, %v526
        %v544 = vadd.f32 %v539, 1e-05
        %v545 = vrsqrt.pop %v544
        %v546 = vmul.f32 %v545, %v544
        %v547 = vmul.f32 %v546, %v545
        %v548 = vmul.f32 0.5, %v547
        %v549 = vsub.f32 1.5, %v548
        %v550 = vmul.f32 %v545, %v549
        %vm551 = vweird.f32 %v544
        %vm552 = vweird.f32 %v545
        %vm553 = vmor %vm551, %vm552
        %v554 = vsel %vm553, %v545, %v550
        %v555 = vmul.f32 %v540, %v554
        %v556 = vmul.f32 %v541, %v554
        %v557 = vmul.f32 %v542, %v554
        %v558 = vmul.f32 %v543, %v554
        %v560 = vperm.slane %v392, 0
        %v561 = vperm.slane %v392, 1
        %v562 = vperm.slane %v392, 2
        %v563 = vperm.slane %v392, 3
        %v568 = vmul.f32 %v555, %v560
        %v569 = vmul.f32 %v556, %v561
        %v570 = vmul.f32 %v557, %v562
        %v571 = vmul.f32 %v558, %v563
        %v573 = vperm.slane %v394, 0
        %v574 = vperm.slane %v394, 1
        %v575 = vperm.slane %v394, 2
        %v576 = vperm.slane %v394, 3
        %v581 = vadd.f32 %v568, %v573
        %v582 = vadd.f32 %v569, %v574
        %v583 = vadd.f32 %v570, %v575
        %v584 = vadd.f32 %v571, %v576
        %v585 = vpack.c.bf16 %v581, %v581
        %v586 = vpack.c.bf16 %v582, %v582
        %v587 = vpack.c.bf16 %v583, %v583
        %v588 = vpack.c.bf16 %v584, %v584
        %v589 = vld [vmem:[%s304] sm:$0xff]
        %v590 = vld [vmem:[%s304 + $0x8] sm:$0xff]
        %v591 = vld [vmem:[%s304 + $0x10] sm:$0xff]
        %v592 = vld [vmem:[%s304 + $0x18] sm:$0xff]
        %v593 = vld [vmem:[%s304 + $0x20] sm:$0xff]
        %v594 = vld [vmem:[%s304 + $0x28] sm:$0xff]
        %v595 = vld [vmem:[%s304 + $0x30] sm:$0xff]
        %v596 = vld [vmem:[%s304 + $0x38] sm:$0xff]
        %v597 = vld [vmem:[%s304 + $0x40] sm:$0xff]
        %v598 = vld [vmem:[%s304 + $0x48] sm:$0xff]
        %v599 = vld [vmem:[%s304 + $0x50] sm:$0xff]
        %v600 = vld [vmem:[%s304 + $0x58] sm:$0xff]
        %v601 = vld [vmem:[%s304 + $0x60] sm:$0xff]
        %v602 = vld [vmem:[%s304 + $0x68] sm:$0xff]
        %v603 = vld [vmem:[%s304 + $0x70] sm:$0xff]
        %v604 = vld [vmem:[%s304 + $0x78] sm:$0xff]
        %v605 = vld [vmem:[%s304 + $0x80] sm:$0xff]
        %v606 = vld [vmem:[%s304 + $0x88] sm:$0xff]
        %v607 = vld [vmem:[%s304 + $0x90] sm:$0xff]
        %v608 = vld [vmem:[%s304 + $0x98] sm:$0xff]
        %v609 = vld [vmem:[%s304 + $0xa0] sm:$0xff]
        %v610 = vld [vmem:[%s304 + $0xa8] sm:$0xff]
        %v611 = vld [vmem:[%s304 + $0xb0] sm:$0xff]
        %v612 = vld [vmem:[%s304 + $0xb8] sm:$0xff]
        %v613 = vld [vmem:[%s304 + $0xc0] sm:$0xff]
        %v614 = vld [vmem:[%s304 + $0xc8] sm:$0xff]
        %v615 = vld [vmem:[%s304 + $0xd0] sm:$0xff]
        %v616 = vld [vmem:[%s304 + $0xd8] sm:$0xff]
        %v617 = vld [vmem:[%s304 + $0xe0] sm:$0xff]
        %v618 = vld [vmem:[%s304 + $0xe8] sm:$0xff]
        %v619 = vld [vmem:[%s304 + $0xf0] sm:$0xff]
        %v620 = vld [vmem:[%s304 + $0xf8] sm:$0xff]
        %v621 = vld [vmem:[%s304 + $0x100] sm:$0xff]
        %v622 = vld [vmem:[%s304 + $0x108] sm:$0xff]
        %v623 = vld [vmem:[%s304 + $0x110] sm:$0xff]
        %v624 = vld [vmem:[%s304 + $0x118] sm:$0xff]
        %v625 = vld [vmem:[%s304 + $0x120] sm:$0xff]
        %v626 = vld [vmem:[%s304 + $0x128] sm:$0xff]
        %v627 = vld [vmem:[%s304 + $0x130] sm:$0xff]
        %v628 = vld [vmem:[%s304 + $0x138] sm:$0xff]
        %v629 = vld [vmem:[%s304 + $0x140] sm:$0xff]
        %v630 = vld [vmem:[%s304 + $0x148] sm:$0xff]
        %v631 = vld [vmem:[%s304 + $0x150] sm:$0xff]
        %v632 = vld [vmem:[%s304 + $0x158] sm:$0xff]
        %v633 = vld [vmem:[%s304 + $0x160] sm:$0xff]
        %v634 = vld [vmem:[%s304 + $0x168] sm:$0xff]
        %v635 = vld [vmem:[%s304 + $0x170] sm:$0xff]
        %v636 = vld [vmem:[%s304 + $0x178] sm:$0xff]
        %v637 = vld [vmem:[%s304 + $0x180] sm:$0xff]
        %v638 = vld [vmem:[%s304 + $0x188] sm:$0xff]
        %v639 = vld [vmem:[%s304 + $0x190] sm:$0xff]
        %v640 = vld [vmem:[%s304 + $0x198] sm:$0xff]
        %v641 = vld [vmem:[%s304 + $0x1a0] sm:$0xff]
        %v642 = vld [vmem:[%s304 + $0x1a8] sm:$0xff]
        %v643 = vld [vmem:[%s304 + $0x1b0] sm:$0xff]
        %v644 = vld [vmem:[%s304 + $0x1b8] sm:$0xff]
        %v645 = vld [vmem:[%s304 + $0x1c0] sm:$0xff]
        %v646 = vld [vmem:[%s304 + $0x1c8] sm:$0xff]
        %v647 = vld [vmem:[%s304 + $0x1d0] sm:$0xff]
        %v648 = vld [vmem:[%s304 + $0x1d8] sm:$0xff]
        %v649 = vld [vmem:[%s304 + $0x1e0] sm:$0xff]
        %v650 = vld [vmem:[%s304 + $0x1e8] sm:$0xff]
        %v651 = vld [vmem:[%s304 + $0x1f0] sm:$0xff]
        %v652 = vld [vmem:[%s304 + $0x1f8] sm:$0xff]
        %v653 = vld [vmem:[%s304 + $0x200] sm:$0xff]
        %v654 = vld [vmem:[%s304 + $0x208] sm:$0xff]
        %v655 = vld [vmem:[%s304 + $0x210] sm:$0xff]
        %v656 = vld [vmem:[%s304 + $0x218] sm:$0xff]
        %v657 = vld [vmem:[%s304 + $0x220] sm:$0xff]
        %v658 = vld [vmem:[%s304 + $0x228] sm:$0xff]
        %v659 = vld [vmem:[%s304 + $0x230] sm:$0xff]
        %v660 = vld [vmem:[%s304 + $0x238] sm:$0xff]
        %v661 = vld [vmem:[%s304 + $0x240] sm:$0xff]
        %v662 = vld [vmem:[%s304 + $0x248] sm:$0xff]
        %v663 = vld [vmem:[%s304 + $0x250] sm:$0xff]
        %v664 = vld [vmem:[%s304 + $0x258] sm:$0xff]
        %v665 = vld [vmem:[%s304 + $0x260] sm:$0xff]
        %v666 = vld [vmem:[%s304 + $0x268] sm:$0xff]
        %v667 = vld [vmem:[%s304 + $0x270] sm:$0xff]
        %v668 = vld [vmem:[%s304 + $0x278] sm:$0xff]
        %v669 = vld [vmem:[%s304 + $0x280] sm:$0xff]
        %v670 = vld [vmem:[%s304 + $0x288] sm:$0xff]
        %v671 = vld [vmem:[%s304 + $0x290] sm:$0xff]
        %v672 = vld [vmem:[%s304 + $0x298] sm:$0xff]
        %v673 = vld [vmem:[%s304 + $0x2a0] sm:$0xff]
        %v674 = vld [vmem:[%s304 + $0x2a8] sm:$0xff]
        %v675 = vld [vmem:[%s304 + $0x2b0] sm:$0xff]
        %v676 = vld [vmem:[%s304 + $0x2b8] sm:$0xff]
        %v677 = vld [vmem:[%s304 + $0x2c0] sm:$0xff]
        %v678 = vld [vmem:[%s304 + $0x2c8] sm:$0xff]
        %v679 = vld [vmem:[%s304 + $0x2d0] sm:$0xff]
        %v680 = vld [vmem:[%s304 + $0x2d8] sm:$0xff]
        %v681 = vld [vmem:[%s304 + $0x2e0] sm:$0xff]
        %v682 = vld [vmem:[%s304 + $0x2e8] sm:$0xff]
        %v683 = vld [vmem:[%s304 + $0x2f0] sm:$0xff]
        %v684 = vld [vmem:[%s304 + $0x2f8] sm:$0xff]
        %v685 = vld [vmem:[%s304 + $0x300] sm:$0xff]
        %v686 = vld [vmem:[%s304 + $0x308] sm:$0xff]
        %v687 = vld [vmem:[%s304 + $0x310] sm:$0xff]
        %v688 = vld [vmem:[%s304 + $0x318] sm:$0xff]
        %v690 = vperm.slane %v396, 0
        %v691 = vperm.slane %v396, 1
        %v692 = vperm.slane %v396, 2
        %v693 = vperm.slane %v396, 3
        %v798 = vunpack.c.l.b16 %v589
        %v799 = vunpack.c.h.b16 %v589
        %v800 = vunpack.c.l.b16 %v590
        %v801 = vunpack.c.h.b16 %v590
        %v802 = vunpack.c.l.b16 %v591
        %v803 = vunpack.c.h.b16 %v591
        %v804 = vunpack.c.l.b16 %v592
        %v805 = vunpack.c.h.b16 %v592
        %v806 = vunpack.c.l.b16 %v593
        %v807 = vunpack.c.h.b16 %v593
        %v808 = vunpack.c.l.b16 %v594
        %v809 = vunpack.c.h.b16 %v594
        %v810 = vunpack.c.l.b16 %v595
        %v811 = vunpack.c.h.b16 %v595
        %v812 = vunpack.c.l.b16 %v596
        %v813 = vunpack.c.h.b16 %v596
        %v814 = vunpack.c.l.b16 %v597
        %v815 = vunpack.c.h.b16 %v597
        %v816 = vunpack.c.l.b16 %v598
        %v817 = vunpack.c.h.b16 %v598
        %v818 = vunpack.c.l.b16 %v599
        %v819 = vunpack.c.h.b16 %v599
        %v820 = vunpack.c.l.b16 %v600
        %v821 = vunpack.c.h.b16 %v600
        %v822 = vunpack.c.l.b16 %v601
        %v823 = vunpack.c.h.b16 %v601
        %v824 = vunpack.c.l.b16 %v602
        %v825 = vunpack.c.h.b16 %v602
        %v826 = vunpack.c.l.b16 %v603
        %v827 = vunpack.c.h.b16 %v603
        %v828 = vunpack.c.l.b16 %v604
        %v829 = vunpack.c.h.b16 %v604
        %v830 = vunpack.c.l.b16 %v605
        %v831 = vunpack.c.h.b16 %v605
        %v832 = vunpack.c.l.b16 %v606
        %v833 = vunpack.c.h.b16 %v606
        %v834 = vunpack.c.l.b16 %v607
        %v835 = vunpack.c.h.b16 %v607
        %v836 = vunpack.c.l.b16 %v608
        %v837 = vunpack.c.h.b16 %v608
        %v838 = vunpack.c.l.b16 %v609
        %v839 = vunpack.c.h.b16 %v609
        %v840 = vunpack.c.l.b16 %v610
        %v841 = vunpack.c.h.b16 %v610
        %v842 = vunpack.c.l.b16 %v611
        %v843 = vunpack.c.h.b16 %v611
        %v844 = vunpack.c.l.b16 %v612
        %v845 = vunpack.c.h.b16 %v612
        %v846 = vunpack.c.l.b16 %v613
        %v847 = vunpack.c.h.b16 %v613
        %v848 = vunpack.c.l.b16 %v614
        %v849 = vunpack.c.h.b16 %v614
        %v850 = vunpack.c.l.b16 %v615
        %v851 = vunpack.c.h.b16 %v615
        %v852 = vunpack.c.l.b16 %v616
        %v853 = vunpack.c.h.b16 %v616
        %v854 = vunpack.c.l.b16 %v617
        %v855 = vunpack.c.h.b16 %v617
        %v856 = vunpack.c.l.b16 %v618
        %v857 = vunpack.c.h.b16 %v618
        %v858 = vunpack.c.l.b16 %v619
        %v859 = vunpack.c.h.b16 %v619
        %v860 = vunpack.c.l.b16 %v620
        %v861 = vunpack.c.h.b16 %v620
        %v862 = vunpack.c.l.b16 %v621
        %v863 = vunpack.c.h.b16 %v621
        %v864 = vunpack.c.l.b16 %v622
        %v865 = vunpack.c.h.b16 %v622
        %v866 = vunpack.c.l.b16 %v623
        %v867 = vunpack.c.h.b16 %v623
        %v868 = vunpack.c.l.b16 %v624
        %v869 = vunpack.c.h.b16 %v624
        %v870 = vunpack.c.l.b16 %v625
        %v871 = vunpack.c.h.b16 %v625
        %v872 = vunpack.c.l.b16 %v626
        %v873 = vunpack.c.h.b16 %v626
        %v874 = vunpack.c.l.b16 %v627
        %v875 = vunpack.c.h.b16 %v627
        %v876 = vunpack.c.l.b16 %v628
        %v877 = vunpack.c.h.b16 %v628
        %v878 = vunpack.c.l.b16 %v629
        %v879 = vunpack.c.h.b16 %v629
        %v880 = vunpack.c.l.b16 %v630
        %v881 = vunpack.c.h.b16 %v630
        %v882 = vunpack.c.l.b16 %v631
        %v883 = vunpack.c.h.b16 %v631
        %v884 = vunpack.c.l.b16 %v632
        %v885 = vunpack.c.h.b16 %v632
        %v886 = vunpack.c.l.b16 %v633
        %v887 = vunpack.c.h.b16 %v633
        %v888 = vunpack.c.l.b16 %v634
        %v889 = vunpack.c.h.b16 %v634
        %v890 = vunpack.c.l.b16 %v635
        %v891 = vunpack.c.h.b16 %v635
        %v892 = vunpack.c.l.b16 %v636
        %v893 = vunpack.c.h.b16 %v636
        %v894 = vunpack.c.l.b16 %v637
        %v895 = vunpack.c.h.b16 %v637
        %v896 = vunpack.c.l.b16 %v638
        %v897 = vunpack.c.h.b16 %v638
        %v898 = vunpack.c.l.b16 %v639
        %v899 = vunpack.c.h.b16 %v639
        %v900 = vunpack.c.l.b16 %v640
        %v901 = vunpack.c.h.b16 %v640
        %v902 = vunpack.c.l.b16 %v641
        %v903 = vunpack.c.h.b16 %v641
        %v904 = vunpack.c.l.b16 %v642
        %v905 = vunpack.c.h.b16 %v642
        %v906 = vunpack.c.l.b16 %v643
        %v907 = vunpack.c.h.b16 %v643
        %v908 = vunpack.c.l.b16 %v644
        %v909 = vunpack.c.h.b16 %v644
        %v910 = vunpack.c.l.b16 %v645
        %v911 = vunpack.c.h.b16 %v645
        %v912 = vunpack.c.l.b16 %v646
        %v913 = vunpack.c.h.b16 %v646
        %v914 = vunpack.c.l.b16 %v647
        %v915 = vunpack.c.h.b16 %v647
        %v916 = vunpack.c.l.b16 %v648
        %v917 = vunpack.c.h.b16 %v648
        %v918 = vunpack.c.l.b16 %v649
        %v919 = vunpack.c.h.b16 %v649
        %v920 = vunpack.c.l.b16 %v650
        %v921 = vunpack.c.h.b16 %v650
        %v922 = vunpack.c.l.b16 %v651
        %v923 = vunpack.c.h.b16 %v651
        %v924 = vunpack.c.l.b16 %v652
        %v925 = vunpack.c.h.b16 %v652
        %v926 = vunpack.c.l.b16 %v653
        %v927 = vunpack.c.h.b16 %v653
        %v928 = vunpack.c.l.b16 %v654
        %v929 = vunpack.c.h.b16 %v654
        %v930 = vunpack.c.l.b16 %v655
        %v931 = vunpack.c.h.b16 %v655
        %v932 = vunpack.c.l.b16 %v656
        %v933 = vunpack.c.h.b16 %v656
        %v934 = vunpack.c.l.b16 %v657
        %v935 = vunpack.c.h.b16 %v657
        %v936 = vunpack.c.l.b16 %v658
        %v937 = vunpack.c.h.b16 %v658
        %v938 = vunpack.c.l.b16 %v659
        %v939 = vunpack.c.h.b16 %v659
        %v940 = vunpack.c.l.b16 %v660
        %v941 = vunpack.c.h.b16 %v660
        %v942 = vunpack.c.l.b16 %v661
        %v943 = vunpack.c.h.b16 %v661
        %v944 = vunpack.c.l.b16 %v662
        %v945 = vunpack.c.h.b16 %v662
        %v946 = vunpack.c.l.b16 %v663
        %v947 = vunpack.c.h.b16 %v663
        %v948 = vunpack.c.l.b16 %v664
        %v949 = vunpack.c.h.b16 %v664
        %v950 = vunpack.c.l.b16 %v665
        %v951 = vunpack.c.h.b16 %v665
        %v952 = vunpack.c.l.b16 %v666
        %v953 = vunpack.c.h.b16 %v666
        %v954 = vunpack.c.l.b16 %v667
        %v955 = vunpack.c.h.b16 %v667
        %v956 = vunpack.c.l.b16 %v668
        %v957 = vunpack.c.h.b16 %v668
        %v958 = vunpack.c.l.b16 %v669
        %v959 = vunpack.c.h.b16 %v669
        %v960 = vunpack.c.l.b16 %v670
        %v961 = vunpack.c.h.b16 %v670
        %v962 = vunpack.c.l.b16 %v671
        %v963 = vunpack.c.h.b16 %v671
        %v964 = vunpack.c.l.b16 %v672
        %v965 = vunpack.c.h.b16 %v672
        %v966 = vunpack.c.l.b16 %v673
        %v967 = vunpack.c.h.b16 %v673
        %v968 = vunpack.c.l.b16 %v674
        %v969 = vunpack.c.h.b16 %v674
        %v970 = vunpack.c.l.b16 %v675
        %v971 = vunpack.c.h.b16 %v675
        %v972 = vunpack.c.l.b16 %v676
        %v973 = vunpack.c.h.b16 %v676
        %v974 = vunpack.c.l.b16 %v677
        %v975 = vunpack.c.h.b16 %v677
        %v976 = vunpack.c.l.b16 %v678
        %v977 = vunpack.c.h.b16 %v678
        %v978 = vunpack.c.l.b16 %v679
        %v979 = vunpack.c.h.b16 %v679
        %v980 = vunpack.c.l.b16 %v680
        %v981 = vunpack.c.h.b16 %v680
        %v982 = vunpack.c.l.b16 %v681
        %v983 = vunpack.c.h.b16 %v681
        %v984 = vunpack.c.l.b16 %v682
        %v985 = vunpack.c.h.b16 %v682
        %v986 = vunpack.c.l.b16 %v683
        %v987 = vunpack.c.h.b16 %v683
        %v988 = vunpack.c.l.b16 %v684
        %v989 = vunpack.c.h.b16 %v684
        %v990 = vunpack.c.l.b16 %v685
        %v991 = vunpack.c.h.b16 %v685
        %v992 = vunpack.c.l.b16 %v686
        %v993 = vunpack.c.h.b16 %v686
        %v994 = vunpack.c.l.b16 %v687
        %v995 = vunpack.c.h.b16 %v687
        %v996 = vunpack.c.l.b16 %v688
        %v997 = vunpack.c.h.b16 %v688
        %v998 = vpack.c.b16 %v802, %v798
        %v999 = vpack.c.b16 %v803, %v799
        %v1000 = vpack.c.b16 %v804, %v800
        %v1001 = vpack.c.b16 %v805, %v801
        %v1002 = vpack.c.b16 %v810, %v806
        %v1003 = vpack.c.b16 %v811, %v807
        %v1004 = vpack.c.b16 %v812, %v808
        %v1005 = vpack.c.b16 %v813, %v809
        %v1006 = vpack.c.b16 %v818, %v814
        %v1007 = vpack.c.b16 %v819, %v815
        %v1008 = vpack.c.b16 %v820, %v816
        %v1009 = vpack.c.b16 %v821, %v817
        %v1010 = vpack.c.b16 %v826, %v822
        %v1011 = vpack.c.b16 %v827, %v823
        %v1012 = vpack.c.b16 %v828, %v824
        %v1013 = vpack.c.b16 %v829, %v825
        %v1014 = vpack.c.b16 %v834, %v830
        %v1015 = vpack.c.b16 %v835, %v831
        %v1016 = vpack.c.b16 %v836, %v832
        %v1017 = vpack.c.b16 %v837, %v833
        %v1018 = vpack.c.b16 %v842, %v838
        %v1019 = vpack.c.b16 %v843, %v839
        %v1020 = vpack.c.b16 %v844, %v840
        %v1021 = vpack.c.b16 %v845, %v841
        %v1022 = vpack.c.b16 %v850, %v846
        %v1023 = vpack.c.b16 %v851, %v847
        %v1024 = vpack.c.b16 %v852, %v848
        %v1025 = vpack.c.b16 %v853, %v849
        %v1026 = vpack.c.b16 %v858, %v854
        %v1027 = vpack.c.b16 %v859, %v855
        %v1028 = vpack.c.b16 %v860, %v856
        %v1029 = vpack.c.b16 %v861, %v857
        %v1030 = vpack.c.b16 %v866, %v862
        %v1031 = vpack.c.b16 %v867, %v863
        %v1032 = vpack.c.b16 %v868, %v864
        %v1033 = vpack.c.b16 %v869, %v865
        %v1034 = vpack.c.b16 %v874, %v870
        %v1035 = vpack.c.b16 %v875, %v871
        %v1036 = vpack.c.b16 %v876, %v872
        %v1037 = vpack.c.b16 %v877, %v873
        %v1038 = vpack.c.b16 %v882, %v878
        %v1039 = vpack.c.b16 %v883, %v879
        %v1040 = vpack.c.b16 %v884, %v880
        %v1041 = vpack.c.b16 %v885, %v881
        %v1042 = vpack.c.b16 %v890, %v886
        %v1043 = vpack.c.b16 %v891, %v887
        %v1044 = vpack.c.b16 %v892, %v888
        %v1045 = vpack.c.b16 %v893, %v889
        %v1046 = vpack.c.b16 %v898, %v894
        %v1047 = vpack.c.b16 %v899, %v895
        %v1048 = vpack.c.b16 %v900, %v896
        %v1049 = vpack.c.b16 %v901, %v897
        %v1050 = vpack.c.b16 %v906, %v902
        %v1051 = vpack.c.b16 %v907, %v903
        %v1052 = vpack.c.b16 %v908, %v904
        %v1053 = vpack.c.b16 %v909, %v905
        %v1054 = vpack.c.b16 %v914, %v910
        %v1055 = vpack.c.b16 %v915, %v911
        %v1056 = vpack.c.b16 %v916, %v912
        %v1057 = vpack.c.b16 %v917, %v913
        %v1058 = vpack.c.b16 %v922, %v918
        %v1059 = vpack.c.b16 %v923, %v919
        %v1060 = vpack.c.b16 %v924, %v920
        %v1061 = vpack.c.b16 %v925, %v921
        %v1062 = vpack.c.b16 %v930, %v926
        %v1063 = vpack.c.b16 %v931, %v927
        %v1064 = vpack.c.b16 %v932, %v928
        %v1065 = vpack.c.b16 %v933, %v929
        %v1066 = vpack.c.b16 %v938, %v934
        %v1067 = vpack.c.b16 %v939, %v935
        %v1068 = vpack.c.b16 %v940, %v936
        %v1069 = vpack.c.b16 %v941, %v937
        %v1070 = vpack.c.b16 %v946, %v942
        %v1071 = vpack.c.b16 %v947, %v943
        %v1072 = vpack.c.b16 %v948, %v944
        %v1073 = vpack.c.b16 %v949, %v945
        %v1074 = vpack.c.b16 %v954, %v950
        %v1075 = vpack.c.b16 %v955, %v951
        %v1076 = vpack.c.b16 %v956, %v952
        %v1077 = vpack.c.b16 %v957, %v953
        %v1078 = vpack.c.b16 %v962, %v958
        %v1079 = vpack.c.b16 %v963, %v959
        %v1080 = vpack.c.b16 %v964, %v960
        %v1081 = vpack.c.b16 %v965, %v961
        %v1082 = vpack.c.b16 %v970, %v966
        %v1083 = vpack.c.b16 %v971, %v967
        %v1084 = vpack.c.b16 %v972, %v968
        %v1085 = vpack.c.b16 %v973, %v969
        %v1086 = vpack.c.b16 %v978, %v974
        %v1087 = vpack.c.b16 %v979, %v975
        %v1088 = vpack.c.b16 %v980, %v976
        %v1089 = vpack.c.b16 %v981, %v977
        %v1090 = vpack.c.b16 %v986, %v982
        %v1091 = vpack.c.b16 %v987, %v983
        %v1092 = vpack.c.b16 %v988, %v984
        %v1093 = vpack.c.b16 %v989, %v985
        %v1094 = vpack.c.b16 %v994, %v990
        %v1095 = vpack.c.b16 %v995, %v991
        %v1096 = vpack.c.b16 %v996, %v992
        %v1097 = vpack.c.b16 %v997, %v993
        %v1199 = vsel %vm387, %v588, 0
        %1201 = vmatpush.bf16.msra.mxu0 %v1026
        %1202 = vmatpush.bf16.msra.mxu0 %v1022
        %1203 = vmatpush.bf16.msra.mxu0 %v1018
        %1204 = vmatpush.bf16.msra.mxu0 %v1014
        %1205 = vmatpush.bf16.msra.mxu0 %v1010
        %1206 = vmatpush.bf16.msra.mxu0 %v1006
        %1207 = vmatpush.bf16.msra.mxu0 %v1002
        %1208 = vmatpush.bf16.msra.mxu0 %v998
        %1209 = vmatmul.bf16.gmra.mxu0 %v585
        %v1210 = vpop.f32.mrf.mxu0
        %v1211 = vadd.f32 %v690, %v1210
        %v1212 = vpop.f32.mrf.mxu0
        %1213 = vdwg.mxu0
        %1214 = vmatpush.bf16.msra.mxu0 %v1058
        %1215 = vmatpush.bf16.msra.mxu0 %v1054
        %1216 = vmatpush.bf16.msra.mxu0 %v1050
        %1217 = vmatpush.bf16.msra.mxu0 %v1046
        %1218 = vmatpush.bf16.msra.mxu0 %v1042
        %1219 = vmatpush.bf16.msra.mxu0 %v1038
        %1220 = vmatpush.bf16.msra.mxu0 %v1034
        %1221 = vmatpush.bf16.msra.mxu0 %v1030
        %1222 = vmatmul.bf16.gmra.mxu0 %v586
        %v1223 = vpop.f32.mrf.mxu0
        %v1224 = vadd.f32 %v1211, %v1223
        %v1225 = vpop.f32.mrf.mxu0
        %1226 = vdwg.mxu0
        %1227 = vmatpush.bf16.msra.mxu0 %v1090
        %1228 = vmatpush.bf16.msra.mxu0 %v1086
        %1229 = vmatpush.bf16.msra.mxu0 %v1082
        %1230 = vmatpush.bf16.msra.mxu0 %v1078
        %1231 = vmatpush.bf16.msra.mxu0 %v1074
        %1232 = vmatpush.bf16.msra.mxu0 %v1070
        %1233 = vmatpush.bf16.msra.mxu0 %v1066
        %1234 = vmatpush.bf16.msra.mxu0 %v1062
        %1235 = vmatmul.bf16.gmra.mxu0 %v587
        %v1236 = vpop.f32.mrf.mxu0
        %v1237 = vadd.f32 %v1224, %v1236
        %v1238 = vpop.f32.mrf.mxu0
        %1239 = vdwg.mxu0
        %1240 = vmatpush.bf16.msra.mxu0 0
        %1241 = vmatpush.bf16.msra.mxu0 0
        %1242 = vmatpush.bf16.msra.mxu0 0
        %1243 = vmatpush.bf16.msra.mxu0 0
        %1244 = vmatpush.bf16.msra.mxu0 0
        %1245 = vmatpush.bf16.msra.mxu0 0
        %1246 = vmatpush.bf16.msra.mxu0 0
        %1247 = vmatpush.bf16.msra.mxu0 %v1094
        %1248 = vmatmul.bf16.gmra.mxu0 %v1199
        %v1249 = vpop.f32.mrf.mxu0
        %v1250 = vadd.f32 %v1237, %v1249
        %v1251 = vpop.f32.mrf.mxu0
        %1252 = vdwg.mxu0
        %1253 = vmatpush.bf16.msra.mxu0 %v1027
        %1254 = vmatpush.bf16.msra.mxu0 %v1023
        %1255 = vmatpush.bf16.msra.mxu0 %v1019
        %1256 = vmatpush.bf16.msra.mxu0 %v1015
        %1257 = vmatpush.bf16.msra.mxu0 %v1011
        %1258 = vmatpush.bf16.msra.mxu0 %v1007
        %1259 = vmatpush.bf16.msra.mxu0 %v1003
        %1260 = vmatpush.bf16.msra.mxu0 %v999
        %1261 = vmatmul.bf16.gmra.mxu0 %v585
        %v1262 = vpop.f32.mrf.mxu0
        %v1263 = vadd.f32 %v691, %v1262
        %v1264 = vpop.f32.mrf.mxu0
        %1265 = vdwg.mxu0
        %1266 = vmatpush.bf16.msra.mxu0 %v1059
        %1267 = vmatpush.bf16.msra.mxu0 %v1055
        %1268 = vmatpush.bf16.msra.mxu0 %v1051
        %1269 = vmatpush.bf16.msra.mxu0 %v1047
        %1270 = vmatpush.bf16.msra.mxu0 %v1043
        %1271 = vmatpush.bf16.msra.mxu0 %v1039
        %1272 = vmatpush.bf16.msra.mxu0 %v1035
        %1273 = vmatpush.bf16.msra.mxu0 %v1031
        %1274 = vmatmul.bf16.gmra.mxu0 %v586
        %v1275 = vpop.f32.mrf.mxu0
        %v1276 = vadd.f32 %v1263, %v1275
        %v1277 = vpop.f32.mrf.mxu0
        %1278 = vdwg.mxu0
        %1279 = vmatpush.bf16.msra.mxu0 %v1091
        %1280 = vmatpush.bf16.msra.mxu0 %v1087
        %1281 = vmatpush.bf16.msra.mxu0 %v1083
        %1282 = vmatpush.bf16.msra.mxu0 %v1079
        %1283 = vmatpush.bf16.msra.mxu0 %v1075
        %1284 = vmatpush.bf16.msra.mxu0 %v1071
        %1285 = vmatpush.bf16.msra.mxu0 %v1067
        %1286 = vmatpush.bf16.msra.mxu0 %v1063
        %1287 = vmatmul.bf16.gmra.mxu0 %v587
        %v1288 = vpop.f32.mrf.mxu0
        %v1289 = vadd.f32 %v1276, %v1288
        %v1290 = vpop.f32.mrf.mxu0
        %1291 = vdwg.mxu0
        %1292 = vmatpush.bf16.msra.mxu0 0
        %1293 = vmatpush.bf16.msra.mxu0 0
        %1294 = vmatpush.bf16.msra.mxu0 0
        %1295 = vmatpush.bf16.msra.mxu0 0
        %1296 = vmatpush.bf16.msra.mxu0 0
        %1297 = vmatpush.bf16.msra.mxu0 0
        %1298 = vmatpush.bf16.msra.mxu0 0
        %1299 = vmatpush.bf16.msra.mxu0 %v1095
        %1300 = vmatmul.bf16.gmra.mxu0 %v1199
        %v1301 = vpop.f32.mrf.mxu0
        %v1302 = vadd.f32 %v1289, %v1301
        %v1303 = vpop.f32.mrf.mxu0
        %1304 = vdwg.mxu0
        %1305 = vmatpush.bf16.msra.mxu0 %v1028
        %1306 = vmatpush.bf16.msra.mxu0 %v1024
        %1307 = vmatpush.bf16.msra.mxu0 %v1020
        %1308 = vmatpush.bf16.msra.mxu0 %v1016
        %1309 = vmatpush.bf16.msra.mxu0 %v1012
        %1310 = vmatpush.bf16.msra.mxu0 %v1008
        %1311 = vmatpush.bf16.msra.mxu0 %v1004
        %1312 = vmatpush.bf16.msra.mxu0 %v1000
        %1313 = vmatmul.bf16.gmra.mxu0 %v585
        %v1314 = vpop.f32.mrf.mxu0
        %v1315 = vadd.f32 %v692, %v1314
        %v1316 = vpop.f32.mrf.mxu0
        %1317 = vdwg.mxu0
        %1318 = vmatpush.bf16.msra.mxu0 %v1060
        %1319 = vmatpush.bf16.msra.mxu0 %v1056
        %1320 = vmatpush.bf16.msra.mxu0 %v1052
        %1321 = vmatpush.bf16.msra.mxu0 %v1048
        %1322 = vmatpush.bf16.msra.mxu0 %v1044
        %1323 = vmatpush.bf16.msra.mxu0 %v1040
        %1324 = vmatpush.bf16.msra.mxu0 %v1036
        %1325 = vmatpush.bf16.msra.mxu0 %v1032
        %1326 = vmatmul.bf16.gmra.mxu0 %v586
        %v1327 = vpop.f32.mrf.mxu0
        %v1328 = vadd.f32 %v1315, %v1327
        %v1329 = vpop.f32.mrf.mxu0
        %1330 = vdwg.mxu0
        %1331 = vmatpush.bf16.msra.mxu0 %v1092
        %1332 = vmatpush.bf16.msra.mxu0 %v1088
        %1333 = vmatpush.bf16.msra.mxu0 %v1084
        %1334 = vmatpush.bf16.msra.mxu0 %v1080
        %1335 = vmatpush.bf16.msra.mxu0 %v1076
        %1336 = vmatpush.bf16.msra.mxu0 %v1072
        %1337 = vmatpush.bf16.msra.mxu0 %v1068
        %1338 = vmatpush.bf16.msra.mxu0 %v1064
        %1339 = vmatmul.bf16.gmra.mxu0 %v587
        %v1340 = vpop.f32.mrf.mxu0
        %v1341 = vadd.f32 %v1328, %v1340
        %v1342 = vpop.f32.mrf.mxu0
        %1343 = vdwg.mxu0
        %1344 = vmatpush.bf16.msra.mxu0 0
        %1345 = vmatpush.bf16.msra.mxu0 0
        %1346 = vmatpush.bf16.msra.mxu0 0
        %1347 = vmatpush.bf16.msra.mxu0 0
        %1348 = vmatpush.bf16.msra.mxu0 0
        %1349 = vmatpush.bf16.msra.mxu0 0
        %1350 = vmatpush.bf16.msra.mxu0 0
        %1351 = vmatpush.bf16.msra.mxu0 %v1096
        %1352 = vmatmul.bf16.gmra.mxu0 %v1199
        %v1353 = vpop.f32.mrf.mxu0
        %v1354 = vadd.f32 %v1341, %v1353
        %v1355 = vpop.f32.mrf.mxu0
        %1356 = vdwg.mxu0
        %1357 = vmatpush.bf16.msra.mxu0 %v1029
        %1358 = vmatpush.bf16.msra.mxu0 %v1025
        %1359 = vmatpush.bf16.msra.mxu0 %v1021
        %1360 = vmatpush.bf16.msra.mxu0 %v1017
        %1361 = vmatpush.bf16.msra.mxu0 %v1013
        %1362 = vmatpush.bf16.msra.mxu0 %v1009
        %1363 = vmatpush.bf16.msra.mxu0 %v1005
        %1364 = vmatpush.bf16.msra.mxu0 %v1001
        %1365 = vmatmul.bf16.gmra.mxu0 %v585
        %v1366 = vpop.f32.mrf.mxu0
        %v1367 = vadd.f32 %v693, %v1366
        %v1368 = vpop.f32.mrf.mxu0
        %1369 = vdwg.mxu0
        %1370 = vmatpush.bf16.msra.mxu0 %v1061
        %1371 = vmatpush.bf16.msra.mxu0 %v1057
        %1372 = vmatpush.bf16.msra.mxu0 %v1053
        %1373 = vmatpush.bf16.msra.mxu0 %v1049
        %1374 = vmatpush.bf16.msra.mxu0 %v1045
        %1375 = vmatpush.bf16.msra.mxu0 %v1041
        %1376 = vmatpush.bf16.msra.mxu0 %v1037
        %1377 = vmatpush.bf16.msra.mxu0 %v1033
        %1378 = vmatmul.bf16.gmra.mxu0 %v586
        %v1379 = vpop.f32.mrf.mxu0
        %v1380 = vadd.f32 %v1367, %v1379
        %v1381 = vpop.f32.mrf.mxu0
        %1382 = vdwg.mxu0
        %1383 = vmatpush.bf16.msra.mxu0 %v1093
        %1384 = vmatpush.bf16.msra.mxu0 %v1089
        %1385 = vmatpush.bf16.msra.mxu0 %v1085
        %1386 = vmatpush.bf16.msra.mxu0 %v1081
        %1387 = vmatpush.bf16.msra.mxu0 %v1077
        %1388 = vmatpush.bf16.msra.mxu0 %v1073
        %1389 = vmatpush.bf16.msra.mxu0 %v1069
        %1390 = vmatpush.bf16.msra.mxu0 %v1065
        %1391 = vmatmul.bf16.gmra.mxu0 %v587
        %v1392 = vpop.f32.mrf.mxu0
        %v1393 = vadd.f32 %v1380, %v1392
        %v1394 = vpop.f32.mrf.mxu0
        %1395 = vdwg.mxu0
        %1396 = vmatpush.bf16.msra.mxu0 0
        %1397 = vmatpush.bf16.msra.mxu0 0
        %1398 = vmatpush.bf16.msra.mxu0 0
        %1399 = vmatpush.bf16.msra.mxu0 0
        %1400 = vmatpush.bf16.msra.mxu0 0
        %1401 = vmatpush.bf16.msra.mxu0 0
        %1402 = vmatpush.bf16.msra.mxu0 0
        %1403 = vmatpush.bf16.msra.mxu0 %v1097
        %1404 = vmatmul.bf16.gmra.mxu0 %v1199
        %v1405 = vpop.f32.mrf.mxu0
        %v1406 = vadd.f32 %v1393, %v1405
        %v1407 = vpop.f32.mrf.mxu0
        %1408 = vdwg.mxu0
        %v1409 = vmax.f32 %v1250, 0.0
        %v1410 = vmax.f32 %v1302, 0.0
        %v1411 = vmax.f32 %v1354, 0.0
        %v1412 = vmax.f32 %v1406, 0.0
        %v1413 = vadd.f32 %v1409, %v1410
        %v1414 = vadd.f32 %v1413, %v1411
        %v1415 = vsel %vm387, %v1412, 0.0
        %v1416 = vadd.f32 %v1414, %v1415
        %1417 = vadd.xlane.f32.xlu0 %v1416
        %v1418 = vpop.xlane.xlu0 %1417
        %v1419 = vmul.f32 %v1418, 0.0025
        %v1420 = vmul.f32 %v1409, %v1409
        %v1421 = vmul.f32 %v1410, %v1410
        %v1422 = vmul.f32 %v1411, %v1411
        %v1423 = vmul.f32 %v1412, %v1412
        %v1424 = vadd.f32 %v1420, %v1421
        %v1425 = vadd.f32 %v1424, %v1422
        %v1426 = vsel %vm387, %v1423, 0.0
        %v1427 = vadd.f32 %v1425, %v1426
        %1428 = vadd.xlane.f32.xlu0 %v1427
        %v1429 = vpop.xlane.xlu0 %1428
        %v1430 = vmul.f32 %v1429, 0.0025
        %v1431 = vmul.f32 %v1419, %v1419
        %v1432 = vsub.f32 %v1430, %v1431
        %v1433 = vsub.f32 %v1409, %v1419
        %v1434 = vsub.f32 %v1410, %v1419
        %v1435 = vsub.f32 %v1411, %v1419
        %v1436 = vsub.f32 %v1412, %v1419
        %v1437 = vadd.f32 %v1432, 1e-05
        %v1438 = vrsqrt.pop %v1437
        %v1439 = vmul.f32 %v1438, %v1437
        %v1440 = vmul.f32 %v1439, %v1438
        %v1441 = vmul.f32 0.5, %v1440
        %v1442 = vsub.f32 1.5, %v1441
        %v1443 = vmul.f32 %v1438, %v1442
        %vm1444 = vweird.f32 %v1437
        %vm1445 = vweird.f32 %v1438
        %vm1446 = vmor %vm1444, %vm1445
        %v1447 = vsel %vm1446, %v1438, %v1443
        %v1448 = vmul.f32 %v1433, %v1447
        %v1449 = vmul.f32 %v1434, %v1447
        %v1450 = vmul.f32 %v1435, %v1447
        %v1451 = vmul.f32 %v1436, %v1447
        %v1453 = vperm.slane %v398, 0
        %v1454 = vperm.slane %v398, 1
        %v1455 = vperm.slane %v398, 2
        %v1456 = vperm.slane %v398, 3
        %v1461 = vmul.f32 %v1448, %v1453
        %v1462 = vmul.f32 %v1449, %v1454
        %v1463 = vmul.f32 %v1450, %v1455
        %v1464 = vmul.f32 %v1451, %v1456
        %v1466 = vperm.slane %v400, 0
        %v1467 = vperm.slane %v400, 1
        %v1468 = vperm.slane %v400, 2
        %v1469 = vperm.slane %v400, 3
        %v1474 = vadd.f32 %v1461, %v1466
        %v1475 = vadd.f32 %v1462, %v1467
        %v1476 = vadd.f32 %v1463, %v1468
        %v1477 = vadd.f32 %v1464, %v1469
        %v1478 = vpack.c.bf16 %v1474, %v1474
        %v1479 = vpack.c.bf16 %v1475, %v1475
        %v1480 = vpack.c.bf16 %v1476, %v1476
        %v1481 = vpack.c.bf16 %v1477, %v1477
        %v1482 = vld [vmem:[%s374] sm:$0xf]
        %v1483 = vld [vmem:[%s374 + $0x4] sm:$0xf]
        %v1484 = vld [vmem:[%s374 + $0x8] sm:$0xf]
        %v1485 = vld [vmem:[%s374 + $0xc] sm:$0xf]
        %v1486 = vld [vmem:[%s374 + $0x10] sm:$0xf]
        %v1487 = vld [vmem:[%s374 + $0x14] sm:$0xf]
        %v1488 = vld [vmem:[%s374 + $0x18] sm:$0xf]
        %v1489 = vld [vmem:[%s374 + $0x1c] sm:$0xf]
        %v1490 = vld [vmem:[%s374 + $0x20] sm:$0xf]
        %v1491 = vld [vmem:[%s374 + $0x24] sm:$0xf]
        %v1492 = vld [vmem:[%s374 + $0x28] sm:$0xf]
        %v1493 = vld [vmem:[%s374 + $0x2c] sm:$0xf]
        %v1494 = vld [vmem:[%s374 + $0x30] sm:$0xf]
        %v1495 = vld [vmem:[%s374 + $0x34] sm:$0xf]
        %v1496 = vld [vmem:[%s374 + $0x38] sm:$0xf]
        %v1497 = vld [vmem:[%s374 + $0x3c] sm:$0xf]
        %v1498 = vld [vmem:[%s374 + $0x40] sm:$0xf]
        %v1499 = vld [vmem:[%s374 + $0x44] sm:$0xf]
        %v1500 = vld [vmem:[%s374 + $0x48] sm:$0xf]
        %v1501 = vld [vmem:[%s374 + $0x4c] sm:$0xf]
        %v1502 = vld [vmem:[%s374 + $0x50] sm:$0xf]
        %v1503 = vld [vmem:[%s374 + $0x54] sm:$0xf]
        %v1504 = vld [vmem:[%s374 + $0x58] sm:$0xf]
        %v1505 = vld [vmem:[%s374 + $0x5c] sm:$0xf]
        %v1506 = vld [vmem:[%s374 + $0x60] sm:$0xf]
        %v1507 = vld [vmem:[%s374 + $0x64] sm:$0xf]
        %v1508 = vld [vmem:[%s374 + $0x68] sm:$0xf]
        %v1509 = vld [vmem:[%s374 + $0x6c] sm:$0xf]
        %v1510 = vld [vmem:[%s374 + $0x70] sm:$0xf]
        %v1511 = vld [vmem:[%s374 + $0x74] sm:$0xf]
        %v1512 = vld [vmem:[%s374 + $0x78] sm:$0xf]
        %v1513 = vld [vmem:[%s374 + $0x7c] sm:$0xf]
        %v1514 = vld [vmem:[%s374 + $0x80] sm:$0xf]
        %v1515 = vld [vmem:[%s374 + $0x84] sm:$0xf]
        %v1516 = vld [vmem:[%s374 + $0x88] sm:$0xf]
        %v1517 = vld [vmem:[%s374 + $0x8c] sm:$0xf]
        %v1518 = vld [vmem:[%s374 + $0x90] sm:$0xf]
        %v1519 = vld [vmem:[%s374 + $0x94] sm:$0xf]
        %v1520 = vld [vmem:[%s374 + $0x98] sm:$0xf]
        %v1521 = vld [vmem:[%s374 + $0x9c] sm:$0xf]
        %v1522 = vld [vmem:[%s374 + $0xa0] sm:$0xf]
        %v1523 = vld [vmem:[%s374 + $0xa4] sm:$0xf]
        %v1524 = vld [vmem:[%s374 + $0xa8] sm:$0xf]
        %v1525 = vld [vmem:[%s374 + $0xac] sm:$0xf]
        %v1526 = vld [vmem:[%s374 + $0xb0] sm:$0xf]
        %v1527 = vld [vmem:[%s374 + $0xb4] sm:$0xf]
        %v1528 = vld [vmem:[%s374 + $0xb8] sm:$0xf]
        %v1529 = vld [vmem:[%s374 + $0xbc] sm:$0xf]
        %v1530 = vld [vmem:[%s374 + $0xc0] sm:$0xf]
        %v1531 = vld [vmem:[%s374 + $0xc4] sm:$0xf]
        %v1582 = vunpack.c.l.b16 %v1482
        %v1583 = vunpack.c.l.b16 %v1483
        %v1584 = vunpack.c.l.b16 %v1484
        %v1585 = vunpack.c.l.b16 %v1485
        %v1586 = vunpack.c.l.b16 %v1486
        %v1587 = vunpack.c.l.b16 %v1487
        %v1588 = vunpack.c.l.b16 %v1488
        %v1589 = vunpack.c.l.b16 %v1489
        %v1590 = vunpack.c.l.b16 %v1490
        %v1591 = vunpack.c.l.b16 %v1491
        %v1592 = vunpack.c.l.b16 %v1492
        %v1593 = vunpack.c.l.b16 %v1493
        %v1594 = vunpack.c.l.b16 %v1494
        %v1595 = vunpack.c.l.b16 %v1495
        %v1596 = vunpack.c.l.b16 %v1496
        %v1597 = vunpack.c.l.b16 %v1497
        %v1598 = vunpack.c.l.b16 %v1498
        %v1599 = vunpack.c.l.b16 %v1499
        %v1600 = vunpack.c.l.b16 %v1500
        %v1601 = vunpack.c.l.b16 %v1501
        %v1602 = vunpack.c.l.b16 %v1502
        %v1603 = vunpack.c.l.b16 %v1503
        %v1604 = vunpack.c.l.b16 %v1504
        %v1605 = vunpack.c.l.b16 %v1505
        %v1606 = vunpack.c.l.b16 %v1506
        %v1607 = vunpack.c.l.b16 %v1507
        %v1608 = vunpack.c.l.b16 %v1508
        %v1609 = vunpack.c.l.b16 %v1509
        %v1610 = vunpack.c.l.b16 %v1510
        %v1611 = vunpack.c.l.b16 %v1511
        %v1612 = vunpack.c.l.b16 %v1512
        %v1613 = vunpack.c.l.b16 %v1513
        %v1614 = vunpack.c.l.b16 %v1514
        %v1615 = vunpack.c.l.b16 %v1515
        %v1616 = vunpack.c.l.b16 %v1516
        %v1617 = vunpack.c.l.b16 %v1517
        %v1618 = vunpack.c.l.b16 %v1518
        %v1619 = vunpack.c.l.b16 %v1519
        %v1620 = vunpack.c.l.b16 %v1520
        %v1621 = vunpack.c.l.b16 %v1521
        %v1622 = vunpack.c.l.b16 %v1522
        %v1623 = vunpack.c.l.b16 %v1523
        %v1624 = vunpack.c.l.b16 %v1524
        %v1625 = vunpack.c.l.b16 %v1525
        %v1626 = vunpack.c.l.b16 %v1526
        %v1627 = vunpack.c.l.b16 %v1527
        %v1628 = vunpack.c.l.b16 %v1528
        %v1629 = vunpack.c.l.b16 %v1529
        %v1630 = vunpack.c.l.b16 %v1530
        %v1631 = vunpack.c.l.b16 %v1531
        %v1632 = vpack.c.b16 %v1583, %v1582
        %v1633 = vpack.c.b16 %v1585, %v1584
        %v1634 = vpack.c.b16 %v1587, %v1586
        %v1635 = vpack.c.b16 %v1589, %v1588
        %v1636 = vpack.c.b16 %v1591, %v1590
        %v1637 = vpack.c.b16 %v1593, %v1592
        %v1638 = vpack.c.b16 %v1595, %v1594
        %v1639 = vpack.c.b16 %v1597, %v1596
        %v1640 = vpack.c.b16 %v1599, %v1598
        %v1641 = vpack.c.b16 %v1601, %v1600
        %v1642 = vpack.c.b16 %v1603, %v1602
        %v1643 = vpack.c.b16 %v1605, %v1604
        %v1644 = vpack.c.b16 %v1607, %v1606
        %v1645 = vpack.c.b16 %v1609, %v1608
        %v1646 = vpack.c.b16 %v1611, %v1610
        %v1647 = vpack.c.b16 %v1613, %v1612
        %v1648 = vpack.c.b16 %v1615, %v1614
        %v1649 = vpack.c.b16 %v1617, %v1616
        %v1650 = vpack.c.b16 %v1619, %v1618
        %v1651 = vpack.c.b16 %v1621, %v1620
        %v1652 = vpack.c.b16 %v1623, %v1622
        %v1653 = vpack.c.b16 %v1625, %v1624
        %v1654 = vpack.c.b16 %v1627, %v1626
        %v1655 = vpack.c.b16 %v1629, %v1628
        %v1656 = vpack.c.b16 %v1631, %v1630
        %v1683 = vsel %vm387, %v1481, 0
        %1685 = vmatpush.bf16.msra.mxu0 %v1639
        %1686 = vmatpush.bf16.msra.mxu0 %v1638
        %1687 = vmatpush.bf16.msra.mxu0 %v1637
        %1688 = vmatpush.bf16.msra.mxu0 %v1636
        %1689 = vmatpush.bf16.msra.mxu0 %v1635
        %1690 = vmatpush.bf16.msra.mxu0 %v1634
        %1691 = vmatpush.bf16.msra.mxu0 %v1633
        %1692 = vmatpush.bf16.msra.mxu0 %v1632
        %1693 = vmatmul.bf16.gmra.mxu0 %v1478
        %v1694 = vpop.f32.mrf.mxu0
        %v1695 = vadd.f32 %v401, %v1694
        %v1696 = vpop.f32.mrf.mxu0
        %1697 = vdwg.mxu0
        %1698 = vmatpush.bf16.msra.mxu0 %v1647
        %1699 = vmatpush.bf16.msra.mxu0 %v1646
        %1700 = vmatpush.bf16.msra.mxu0 %v1645
        %1701 = vmatpush.bf16.msra.mxu0 %v1644
        %1702 = vmatpush.bf16.msra.mxu0 %v1643
        %1703 = vmatpush.bf16.msra.mxu0 %v1642
        %1704 = vmatpush.bf16.msra.mxu0 %v1641
        %1705 = vmatpush.bf16.msra.mxu0 %v1640
        %1706 = vmatmul.bf16.gmra.mxu0 %v1479
        %v1707 = vpop.f32.mrf.mxu0
        %v1708 = vadd.f32 %v1695, %v1707
        %v1709 = vpop.f32.mrf.mxu0
        %1710 = vdwg.mxu0
        %1711 = vmatpush.bf16.msra.mxu0 %v1655
        %1712 = vmatpush.bf16.msra.mxu0 %v1654
        %1713 = vmatpush.bf16.msra.mxu0 %v1653
        %1714 = vmatpush.bf16.msra.mxu0 %v1652
        %1715 = vmatpush.bf16.msra.mxu0 %v1651
        %1716 = vmatpush.bf16.msra.mxu0 %v1650
        %1717 = vmatpush.bf16.msra.mxu0 %v1649
        %1718 = vmatpush.bf16.msra.mxu0 %v1648
        %1719 = vmatmul.bf16.gmra.mxu0 %v1480
        %v1720 = vpop.f32.mrf.mxu0
        %v1721 = vadd.f32 %v1708, %v1720
        %v1722 = vpop.f32.mrf.mxu0
        %1723 = vdwg.mxu0
        %1724 = vmatpush.bf16.msra.mxu0 0
        %1725 = vmatpush.bf16.msra.mxu0 0
        %1726 = vmatpush.bf16.msra.mxu0 0
        %1727 = vmatpush.bf16.msra.mxu0 0
        %1728 = vmatpush.bf16.msra.mxu0 0
        %1729 = vmatpush.bf16.msra.mxu0 0
        %1730 = vmatpush.bf16.msra.mxu0 0
        %1731 = vmatpush.bf16.msra.mxu0 %v1656
        %1732 = vmatmul.bf16.gmra.mxu0 %v1683
        %v1733 = vpop.f32.mrf.mxu0
        %v1734 = vadd.f32 %v1721, %v1733
        %v1735 = vpop.f32.mrf.mxu0
        %1736 = vdwg.mxu0
        %1737 = vst [vmem:[%s356] sm:$0xff] 0.0
        %p1738 = scmp.eq.s32.totalorder %s27, 0
        // Predicated region
        $region49: #{tpu_custom_call.1} parent=43 // pred_check
          %p1739 = pneg %p1738
        $region50: #{tpu_custom_call.1} parent=43 // pred_check_branch
          %1741 = sbr.rel (%p1739) target = $region52
        $region51: #{tpu_custom_call.1} parent=43 // pred_region
          %1742 = vst.msk [vmem:[%s356] sm:$0xff] %vm387, %v1734
        $region52: #{tpu_custom_call.1} parent=43 // pred_fallthru
          _
        %p1743 = scmp.eq.s32.totalorder %s27, 1
        // Predicated region
        $region53: #{tpu_custom_call.1} parent=43 // pred_check
          %p1744 = pneg %p1743
        $region54: #{tpu_custom_call.1} parent=43 // pred_check_branch
          %1746 = sbr.rel (%p1744) target = $region56
        $region55: #{tpu_custom_call.1} parent=43 // pred_region
          %v1747 = vmax.f32 %v1734, -13.815511
          %v1748 = vmin.f32 %v1747, 13.815511
          %v1749 = vmul.f32 %v1748, 1.442695
          %v1750 = vpow.pop %v1749
          %1751 = vst.msk [vmem:[%s356] sm:$0xff] %vm387, %v1750
        $region56: #{tpu_custom_call.1} parent=43 // pred_fallthru
          _
        %s1752 = sand.u32 %s201, 1
        %s1753 = scalar_lea.sflag [#allocation4], %s1752
        %s1754 = sand.u32 %s201, 1
        %s1755 = smul.addr %s1754, 8
        %s1756 = scalar_lea.vmem [#allocation5], %s1755
        // Predicated region
        $region57: #{tpu_custom_call.1} parent=43 // pred_check
          %p1757 = pneg %p211
        $region58: #{tpu_custom_call.1} parent=43 // pred_check_branch
          %1759 = sbr.rel (%p1757) target = $region60
        $region59: #{tpu_custom_call.1} parent=43 // pred_region
          %1761 = vsyncadd %s1753, 0
          %s1762 = sadd.s32 %s28, %s27
          %s1763 = smul.addr %s1762, 8
          %s1764 = scalar_lea.hbm %s6, %s1763
          %s1766 = sshll.u32 %s1756, 4
          %s1767 = int_to_ptr.vmem [resolvable:$true] %s1766
          %s1768 = sshll.u32 %s1764, 4
          %s1769 = int_to_ptr.hbm [resolvable:$true] %s1768
          %1771 = dma.vmem_to_hbm [thread:$0]  %s1767, 128, %s1769, %s1753
        $region60: #{tpu_custom_call.1} parent=43 // pred_fallthru
          _
      $region44: #{tpu_custom_call.1} parent=5 // pred_fallthru
        _
      %p1772 = scmp.le.s32.totalorder 2, %s18
      // Predicated region
      $region61: #{tpu_custom_call.1} parent=5 // pred_check
        %p1773 = pneg %p1772
      $region62: #{tpu_custom_call.1} parent=5 // pred_check_branch
        %1775 = sbr.rel (%p1773) target = $region64
      $region63: #{tpu_custom_call.1} parent=5 // pred_region
        %s1776 = ssub.s32 %s18, 2
        // Predicated region
        $region65: #{tpu_custom_call.1} parent=63 // pred_check
          %p1777 = pneg %p217
        $region66: #{tpu_custom_call.1} parent=63 // pred_check_branch
          %1779 = sbr.rel (%p1777) target = $region68
        $region67: #{tpu_custom_call.1} parent=63 // pred_region
          %s1780 = sand.u32 %s202, 1
          %s1781 = scalar_lea.sflag [#allocation4], %s1780
          %s1782 = sand.u32 %s202, 1
          %s1783 = smul.addr %s1782, 8
          %s1784 = scalar_lea.vmem [#allocation5], %s1783
          %1786 = dma.done %s1781, 128
        $region68: #{tpu_custom_call.1} parent=63 // pred_fallthru
          _
      $region64: #{tpu_custom_call.1} parent=5 // pred_fallthru
        _
    $region6: #{tpu_custom_call.1} parent=1 // loop_footer
      %s22 = sadd.s32 1, %s18
    $region7: #{tpu_custom_call.1} parent=1 // loop_footer_branch
      %17 = sbr.rel target = $region3
    $region8: #{tpu_custom_call.1} parent=1 // loop_exit
      _
    %1787 = vsyncpa [#allocation3], 1
    %s1788 = scalar_lea.sflag [#allocation3], 1
    %1789 = vsyncpa %s1788, 1
    %1790 = vsyncpa [#allocation4], 1
    %s1791 = scalar_lea.sflag [#allocation4], 1
    %1792 = vsyncpa %s1791, 1

</llo_original>
